<compile_context>
chip_gen: v6e
topology: v6e:2x2x1
jax: 0.10.0
libtpu: 0.0.40
codegen_flags: <defaults>
</compile_context>

<pallas_src>
import functools

import jax
import jax.numpy as jnp
from jax.experimental import pallas as pl
from jax.experimental.pallas import tpu as pltpu

_BN_EPS = 1e-5


def _uniform(key, shape, fan_in):
    bound = 1.0 / (fan_in ** 0.5)
    return jax.random.uniform(key, shape, jnp.float32, -bound, bound)


def _bn_fold(num_features):
    """Eval-mode BatchNorm1d at __init__ state -> per-channel (scale, shift)."""
    gamma = jnp.ones((num_features,), jnp.float32)
    beta = jnp.zeros((num_features,), jnp.float32)
    mean = jnp.zeros((num_features,), jnp.float32)
    var = jnp.ones((num_features,), jnp.float32)
    s = gamma / jnp.sqrt(var + _BN_EPS)
    return s, beta - mean * s


def _round_up(x, m):
    return ((x + m - 1) // m) * m


def _build_fused_kernel(B, K, L0, C0, layers, mm_dtype):
    """Whole-decoder kernel: runs once (no grid), everything resident in VMEM.

    Ref order: z, w_lin, lin_shift, [w_i, shift_i]*n_conv, out,
               hflat_scratch, slab_0 ... slab_{n_conv-1}
    """
    n_conv = len(layers)

    def kernel(*refs):
        z_ref, w_lin_ref, lin_shift_ref = refs[0], refs[1], refs[2]
        conv_refs = refs[3:3 + 2 * n_conv]
        o_ref = refs[3 + 2 * n_conv]
        hflat_ref = refs[4 + 2 * n_conv]
        slab_refs = refs[5 + 2 * n_conv:]

        # ---- Linear (+ folded BatchNorm) + ReLU --------------------------------
        # w_lin columns are pre-permuted so the flat output is already in
        # (position, channel) order: DeFlatten's reshape+transpose is free.
        h = jnp.dot(z_ref[...].astype(mm_dtype), w_lin_ref[...],
                    preferred_element_type=jnp.float32)
        h = jnp.maximum(h + lin_shift_ref[...], 0.0)            # f32 epilogue
        hflat_ref[...] = h.astype(mm_dtype)

        # ---- DeFlatten + first layer's zero padding ----------------------------
        # Zero the padded slab once, then write each position's channel chunk at
        # its row offset; the untouched rows ARE the ConstantPad1d / transposed-
        # conv padding (feedback: "zero-init slab + offset writes", no jnp.pad).
        first = layers[0]
        s0 = slab_refs[0]
        s0[...] = jnp.zeros(s0.shape, s0.dtype)
        for l in range(L0):                                      # static unroll
            s0[:, first["pad_l"] + l, :] = hflat_ref[:, l * C0:(l + 1) * C0]

        # ---- conv / conv-transpose stack ---------------------------------------
        for li, lyr in enumerate(layers):
            w_ref = conv_refs[2 * li]           # (K, Cin, Cout), BN scale folded in
            shift_ref = conv_refs[2 * li + 1]   # (1, Cout) f32  (BN shift / bias)
            slab = slab_refs[li]                # (B, L_cmp+K-1, Cin), zero-padded
            C_in, C_out = lyr["C_in"], lyr["C_out"]
            L_out, L_cmp = lyr["L_out"], lyr["L_cmp"]

            # K tap dots with the batch folded into the matmul M dimension.
            acc = None
            for k in range(K):                  # K small & static -> unrolled
                xk = slab[:, k:k + L_cmp, :].reshape(B * L_cmp, C_in)
                d = jnp.dot(xk, w_ref[k], preferred_element_type=jnp.float32)
                acc = d if acc is None else acc + d
            y = acc + shift_ref[...]            # f32 epilogue (v5e-friendly)
            y = jnp.tanh(y) if lyr["act"] == "tanh" else jnp.maximum(y, 0.0)
            y = y.reshape(B, L_cmp, C_out)
            if L_cmp != L_out:                  # drop rows computed only for alignment
                y = y[:, :L_out, :]

            if li + 1 < n_conv:
                nxt = layers[li + 1]
                s_next = slab_refs[li + 1]
                s_next[...] = jnp.zeros(s_next.shape, s_next.dtype)
                s_next[:, nxt["pad_l"]:nxt["pad_l"] + L_out, :] = y.astype(s_next.dtype)
            else:
                # Final store; (B, C, L) transpose is done in the XLA wrapper.
                o_ref[...] = y.astype(o_ref.dtype)

    return kernel


class PallasDecoder:
    """JAX/Pallas port of the PyTorch Decoder (inference semantics)."""

    def __init__(self, in_channels, base_filters, kernel_size, num_layers,
                 latent_dim, seq_len, dropout, key, matmul_dtype=jnp.bfloat16):
        self.in_channels = in_channels
        self.base_filters = base_filters
        self.K = K = kernel_size
        self.num_layers = num_layers
        self.latent_dim = latent_dim
        self.seq_len = seq_len
        self.dropout = dropout                      # eval mode -> identity
        self.mm_dtype = matmul_dtype                # MXU-boundary dtype

        cut_off = num_layers // 2 * (K - K % 2)
        self.C0 = C0 = min(num_layers * base_filters, 64)    # max_filters
        self.L0 = L0 = seq_len - cut_off                     # reduced_seq_len
        self.flat_dim = flat_dim = L0 * C0

        keys = iter(jax.random.split(key, 4 + 2 * num_layers))

        # ---- Linear(latent, flat) + BatchNorm1d(flat) fold + DeFlatten fold ----
        w_lin = _uniform(next(keys), (latent_dim, flat_dim), latent_dim)
        b_lin = _uniform(next(keys), (flat_dim,), latent_dim)
        s, t = _bn_fold(flat_dim)
        w_lin = w_lin * s[None, :]
        shift = b_lin * s + t
        # DeFlatten = x.view(B, C0, L0); the kernel wants (B, L, C), so permute the
        # flat columns from channel-major (c*L0+l) to position-major (l*C0+c).
        j = jnp.arange(flat_dim)
        perm = (j % C0) * L0 + (j // C0)
        self.w_lin = w_lin[:, perm].astype(matmul_dtype)
        self.lin_shift = shift[perm].reshape(1, -1)          # stays f32

        # ---- conv stack: i = num_layers-1 ... 1, then final ConvTranspose ------
        layers, params = [], []
        L = L0
        for i in range(num_layers - 1, 0, -1):
            in_f = min((i + 1) * base_filters, 64)
            out_f = min(i * base_filters, 64)
            use_padding = (i % 2 == 1)
            if use_padding:
                # ConstantPad1d((K-1, 0)) + Conv1d(in_f, out_f, K, bias=False)
                w = _uniform(next(keys), (out_f, in_f, K), in_f * K)
                w_kic = jnp.transpose(w, (2, 1, 0))          # (K, Cin, Cout)
                pad_l, pad_r, L_out = K - 1, 0, L
            else:
                # ConvTranspose1d(in_f, out_f, K, bias=False), stride 1
                #   == full zero-pad + correlation with the tap-flipped kernel
                w = _uniform(next(keys), (in_f, out_f, K), in_f * K)
                w_kic = jnp.transpose(w[:, :, ::-1], (2, 0, 1))
                pad_l, pad_r, L_out = K - 1, K - 1, L + K - 1
            _ = next(keys)                                   # deterministic key use
            s, t = _bn_fold(out_f)
            w_kic = w_kic * s[None, None, :]                 # fold BN scale into weights
            layers.append(self._layer(in_f, out_f, L, L_out, pad_l, pad_r, "relu", K))
            params += [w_kic.astype(matmul_dtype), t.reshape(1, -1)]
            L = L_out

        # Final ConvTranspose1d(base_filters, in_channels, K) with bias, then Tanh.
        w = _uniform(next(keys), (base_filters, in_channels, K), base_filters * K)
        b = _uniform(next(keys), (in_channels,), base_filters * K)
        w_kic = jnp.transpose(w[:, :, ::-1], (2, 0, 1))
        layers.append(self._layer(base_filters, in_channels, L, L + K - 1,
                                  K - 1, K - 1, "tanh", K))
        params += [w_kic.astype(matmul_dtype), b.reshape(1, -1)]

        self.layers = layers
        self.params = tuple(params)
        self.L_final = L + K - 1

    @staticmethod
    def _layer(c_in, c_out, l_in, l_out, pad_l, pad_r, act, K):
        # L_cmp: compute length rounded to a multiple of 16 so the in-kernel
        # (B, L, C) <-> (B*L, C) leading-dim reshapes are clean tile stackings
        # for both f32 (8-row) and bf16 (16-row packed) layouts; extra rows read
        # zero padding and are sliced off before use.
        l_cmp = _round_up(l_out, 16)
        return dict(C_in=c_in, C_out=c_out, L_in=l_in, L_out=l_out,
                    pad_l=pad_l, pad_r=pad_r, act=act,
                    L_cmp=l_cmp, rows=l_cmp + K - 1)

    @functools.partial(jax.jit, static_argnums=0)
    def __call__(self, z):
        # z: (B, latent_dim)  ->  (B, in_channels, L_final)
        B = z.shape[0]
        kernel = _build_fused_kernel(B, self.K, self.L0, self.C0, self.layers,
                                     self.mm_dtype)
        scratch = [pltpu.VMEM((B, self.flat_dim), self.mm_dtype)]
        scratch += [pltpu.VMEM((B, lyr["rows"], lyr["C_in"]), self.mm_dtype)
                    for lyr in self.layers]
        out = pl.pallas_call(
            kernel,
            out_shape=jax.ShapeDtypeStruct((B, self.L_final, self.in_channels),
                                           jnp.float32),
            scratch_shapes=scratch,
        )(z, self.w_lin, self.lin_shift, *self.params)
        # Tiny (B, L, C) -> (B, C, L) transpose stays in the wrapper (PyTorch layout).
        return jnp.transpose(out, (0, 2, 1))


if __name__ == "__main__":
    key = jax.random.PRNGKey(0)
    pkey, dkey = jax.random.split(key)

    B = 2
    in_channels, base_filters, kernel_size = 4, 8, 3
    num_layers, latent_dim, seq_len, dropout = 3, 16, 16, 0.1

    decoder = PallasDecoder(in_channels, base_filters, kernel_size, num_layers,
                            latent_dim, seq_len, dropout, key=pkey)

    z = jax.random.normal(dkey, (B, latent_dim), jnp.float32)
    out = decoder(z)
    jax.block_until_ready(out)

    # Expected: (B, in_channels, 18) for these settings; values in (-1, 1) from tanh.
    assert out.shape == (B, in_channels, 18), out.shape
    assert bool(jnp.all(jnp.isfinite(out)))
    assert bool(jnp.all(jnp.abs(out) <= 1.0 + 1e-3))
    print("KERNEL_OK")
</pallas_src>

<mosaic_0001>
module attributes {stable_mosaic.version = 11 : i64} {
  func.func @kernel(%arg0: memref<2x16xf32, #tpu.memory_space<vmem>>, %arg1: memref<16x336xbf16, #tpu.memory_space<vmem>>, %arg2: memref<1x336xf32, #tpu.memory_space<vmem>>, %arg3: memref<3x24x16xbf16, #tpu.memory_space<vmem>>, %arg4: memref<1x16xf32, #tpu.memory_space<vmem>>, %arg5: memref<3x16x8xbf16, #tpu.memory_space<vmem>>, %arg6: memref<1x8xf32, #tpu.memory_space<vmem>>, %arg7: memref<3x8x4xbf16, #tpu.memory_space<vmem>>, %arg8: memref<1x4xf32, #tpu.memory_space<vmem>>, %arg9: memref<2x18x4xf32, #tpu.memory_space<vmem>>, %arg10: memref<2x336xbf16, #tpu.memory_space<vmem>>, %arg11: memref<2x18x24xbf16, #tpu.memory_space<vmem>>, %arg12: memref<2x18x16xbf16, #tpu.memory_space<vmem>>, %arg13: memref<2x34x8xbf16, #tpu.memory_space<vmem>>) attributes {dimension_semantics = [], scalar_prefetch = 0 : i64, scratch_operands = 4 : i64, tpu.core_type = #tpu.core_type<tc>} {
    %c0 = arith.constant 0 : index
    %c0_0 = arith.constant 0 : index
    %0 = vector.load %arg0[%c0, %c0_0] : memref<2x16xf32, #tpu.memory_space<vmem>>, vector<2x16xf32>
    %1 = arith.truncf %0 : vector<2x16xf32> to vector<2x16xbf16>
    %c0_1 = arith.constant 0 : index
    %c0_2 = arith.constant 0 : index
    %2 = vector.load %arg1[%c0_1, %c0_2] : memref<16x336xbf16, #tpu.memory_space<vmem>>, vector<16x336xbf16>
    %cst = arith.constant dense<0.000000e+00> : vector<2x336xf32>
    %3 = tpu.matmul %1, %2, %cst {dimension_numbers = #tpu.dot_dimension_numbers<[1], [0], [0], [1], [0, 0, 1, 1], [], []>} : vector<2x16xbf16>, vector<16x336xbf16>, vector<2x336xf32> -> vector<2x336xf32>
    %c0_3 = arith.constant 0 : index
    %c0_4 = arith.constant 0 : index
    %4 = vector.load %arg2[%c0_3, %c0_4] : memref<1x336xf32, #tpu.memory_space<vmem>>, vector<1x336xf32>
    %5 = vector.broadcast %4 : vector<1x336xf32> to vector<2x336xf32>
    %6 = arith.addf %3, %5 : vector<2x336xf32>
    %cst_5 = arith.constant 0.000000e+00 : f32
    %7 = vector.broadcast %cst_5 : f32 to vector<2x336xf32>
    %8 = arith.maximumf %6, %7 : vector<2x336xf32>
    %9 = arith.truncf %8 : vector<2x336xf32> to vector<2x336xbf16>
    %c0_6 = arith.constant 0 : index
    %c0_7 = arith.constant 0 : index
    %10 = vector.load %arg10[%c0_6, %c0_7] : memref<2x336xbf16, #tpu.memory_space<vmem>>, vector<2x336xbf16>
    tpu.vector_store %arg10[%c0_6, %c0_7], %9 {strides = array<i32>} : memref<2x336xbf16, #tpu.memory_space<vmem>>, vector<2x336xbf16>,
    %cst_8 = arith.constant 0.000000e+00 : bf16
    %11 = vector.broadcast %cst_8 : bf16 to vector<2x18x24xbf16>
    %c0_9 = arith.constant 0 : index
    %c0_10 = arith.constant 0 : index
    %c0_11 = arith.constant 0 : index
    %12 = vector.load %arg11[%c0_9, %c0_10, %c0_11] : memref<2x18x24xbf16, #tpu.memory_space<vmem>>, vector<2x18x24xbf16>
    tpu.vector_store %arg11[%c0_9, %c0_10, %c0_11], %11 {strides = array<i32>} : memref<2x18x24xbf16, #tpu.memory_space<vmem>>, vector<2x18x24xbf16>,
    %c0_12 = arith.constant 0 : index
    %c0_13 = arith.constant 0 : index
    %13 = vector.load %arg10[%c0_12, %c0_13] : memref<2x336xbf16, #tpu.memory_space<vmem>>, vector<2x24xbf16>
    %c0_14 = arith.constant 0 : index
    %c2 = arith.constant 2 : index
    %c0_15 = arith.constant 0 : index
    %14 = vector.load %arg11[%c0_14, %c2, %c0_15] : memref<2x18x24xbf16, #tpu.memory_space<vmem>>, vector<2x1x24xbf16>
    %15 = vector.shape_cast %14 : vector<2x1x24xbf16> to vector<2x24xbf16>
    %16 = vector.shape_cast %13 : vector<2x24xbf16> to vector<2x1x24xbf16>
    tpu.vector_store %arg11[%c0_14, %c2, %c0_15], %16 {strides = array<i32>} : memref<2x18x24xbf16, #tpu.memory_space<vmem>>, vector<2x1x24xbf16>,
    %c0_16 = arith.constant 0 : index
    %c24 = arith.constant 24 : index
    %17 = vector.load %arg10[%c0_16, %c24] : memref<2x336xbf16, #tpu.memory_space<vmem>>, vector<2x24xbf16>
    %c0_17 = arith.constant 0 : index
    %c3 = arith.constant 3 : index
    %c0_18 = arith.constant 0 : index
    %18 = vector.load %arg11[%c0_17, %c3, %c0_18] : memref<2x18x24xbf16, #tpu.memory_space<vmem>>, vector<2x1x24xbf16>
    %19 = vector.shape_cast %18 : vector<2x1x24xbf16> to vector<2x24xbf16>
    %20 = vector.shape_cast %17 : vector<2x24xbf16> to vector<2x1x24xbf16>
    tpu.vector_store %arg11[%c0_17, %c3, %c0_18], %20 {strides = array<i32>} : memref<2x18x24xbf16, #tpu.memory_space<vmem>>, vector<2x1x24xbf16>,
    %c0_19 = arith.constant 0 : index
    %c48 = arith.constant 48 : index
    %21 = vector.load %arg10[%c0_19, %c48] : memref<2x336xbf16, #tpu.memory_space<vmem>>, vector<2x24xbf16>
    %c0_20 = arith.constant 0 : index
    %c4 = arith.constant 4 : index
    %c0_21 = arith.constant 0 : index
    %22 = vector.load %arg11[%c0_20, %c4, %c0_21] : memref<2x18x24xbf16, #tpu.memory_space<vmem>>, vector<2x1x24xbf16>
    %23 = vector.shape_cast %22 : vector<2x1x24xbf16> to vector<2x24xbf16>
    %24 = vector.shape_cast %21 : vector<2x24xbf16> to vector<2x1x24xbf16>
    tpu.vector_store %arg11[%c0_20, %c4, %c0_21], %24 {strides = array<i32>} : memref<2x18x24xbf16, #tpu.memory_space<vmem>>, vector<2x1x24xbf16>,
    %c0_22 = arith.constant 0 : index
    %c72 = arith.constant 72 : index
    %25 = vector.load %arg10[%c0_22, %c72] : memref<2x336xbf16, #tpu.memory_space<vmem>>, vector<2x24xbf16>
    %c0_23 = arith.constant 0 : index
    %c5 = arith.constant 5 : index
    %c0_24 = arith.constant 0 : index
    %26 = vector.load %arg11[%c0_23, %c5, %c0_24] : memref<2x18x24xbf16, #tpu.memory_space<vmem>>, vector<2x1x24xbf16>
    %27 = vector.shape_cast %26 : vector<2x1x24xbf16> to vector<2x24xbf16>
    %28 = vector.shape_cast %25 : vector<2x24xbf16> to vector<2x1x24xbf16>
    tpu.vector_store %arg11[%c0_23, %c5, %c0_24], %28 {strides = array<i32>} : memref<2x18x24xbf16, #tpu.memory_space<vmem>>, vector<2x1x24xbf16>,
    %c0_25 = arith.constant 0 : index
    %c96 = arith.constant 96 : index
    %29 = vector.load %arg10[%c0_25, %c96] : memref<2x336xbf16, #tpu.memory_space<vmem>>, vector<2x24xbf16>
    %c0_26 = arith.constant 0 : index
    %c6 = arith.constant 6 : index
    %c0_27 = arith.constant 0 : index
    %30 = vector.load %arg11[%c0_26, %c6, %c0_27] : memref<2x18x24xbf16, #tpu.memory_space<vmem>>, vector<2x1x24xbf16>
    %31 = vector.shape_cast %30 : vector<2x1x24xbf16> to vector<2x24xbf16>
    %32 = vector.shape_cast %29 : vector<2x24xbf16> to vector<2x1x24xbf16>
    tpu.vector_store %arg11[%c0_26, %c6, %c0_27], %32 {strides = array<i32>} : memref<2x18x24xbf16, #tpu.memory_space<vmem>>, vector<2x1x24xbf16>,
    %c0_28 = arith.constant 0 : index
    %c120 = arith.constant 120 : index
    %33 = vector.load %arg10[%c0_28, %c120] : memref<2x336xbf16, #tpu.memory_space<vmem>>, vector<2x24xbf16>
    %c0_29 = arith.constant 0 : index
    %c7 = arith.constant 7 : index
    %c0_30 = arith.constant 0 : index
    %34 = vector.load %arg11[%c0_29, %c7, %c0_30] : memref<2x18x24xbf16, #tpu.memory_space<vmem>>, vector<2x1x24xbf16>
    %35 = vector.shape_cast %34 : vector<2x1x24xbf16> to vector<2x24xbf16>
    %36 = vector.shape_cast %33 : vector<2x24xbf16> to vector<2x1x24xbf16>
    tpu.vector_store %arg11[%c0_29, %c7, %c0_30], %36 {strides = array<i32>} : memref<2x18x24xbf16, #tpu.memory_space<vmem>>, vector<2x1x24xbf16>,
    %c0_31 = arith.constant 0 : index
    %c144 = arith.constant 144 : index
    %37 = vector.load %arg10[%c0_31, %c144] : memref<2x336xbf16, #tpu.memory_space<vmem>>, vector<2x24xbf16>
    %c0_32 = arith.constant 0 : index
    %c8 = arith.constant 8 : index
    %c0_33 = arith.constant 0 : index
    %38 = vector.load %arg11[%c0_32, %c8, %c0_33] : memref<2x18x24xbf16, #tpu.memory_space<vmem>>, vector<2x1x24xbf16>
    %39 = vector.shape_cast %38 : vector<2x1x24xbf16> to vector<2x24xbf16>
    %40 = vector.shape_cast %37 : vector<2x24xbf16> to vector<2x1x24xbf16>
    tpu.vector_store %arg11[%c0_32, %c8, %c0_33], %40 {strides = array<i32>} : memref<2x18x24xbf16, #tpu.memory_space<vmem>>, vector<2x1x24xbf16>,
    %c0_34 = arith.constant 0 : index
    %c168 = arith.constant 168 : index
    %41 = vector.load %arg10[%c0_34, %c168] : memref<2x336xbf16, #tpu.memory_space<vmem>>, vector<2x24xbf16>
    %c0_35 = arith.constant 0 : index
    %c9 = arith.constant 9 : index
    %c0_36 = arith.constant 0 : index
    %42 = vector.load %arg11[%c0_35, %c9, %c0_36] : memref<2x18x24xbf16, #tpu.memory_space<vmem>>, vector<2x1x24xbf16>
    %43 = vector.shape_cast %42 : vector<2x1x24xbf16> to vector<2x24xbf16>
    %44 = vector.shape_cast %41 : vector<2x24xbf16> to vector<2x1x24xbf16>
    tpu.vector_store %arg11[%c0_35, %c9, %c0_36], %44 {strides = array<i32>} : memref<2x18x24xbf16, #tpu.memory_space<vmem>>, vector<2x1x24xbf16>,
    %c0_37 = arith.constant 0 : index
    %c192 = arith.constant 192 : index
    %45 = vector.load %arg10[%c0_37, %c192] : memref<2x336xbf16, #tpu.memory_space<vmem>>, vector<2x24xbf16>
    %c0_38 = arith.constant 0 : index
    %c10 = arith.constant 10 : index
    %c0_39 = arith.constant 0 : index
    %46 = vector.load %arg11[%c0_38, %c10, %c0_39] : memref<2x18x24xbf16, #tpu.memory_space<vmem>>, vector<2x1x24xbf16>
    %47 = vector.shape_cast %46 : vector<2x1x24xbf16> to vector<2x24xbf16>
    %48 = vector.shape_cast %45 : vector<2x24xbf16> to vector<2x1x24xbf16>
    tpu.vector_store %arg11[%c0_38, %c10, %c0_39], %48 {strides = array<i32>} : memref<2x18x24xbf16, #tpu.memory_space<vmem>>, vector<2x1x24xbf16>,
    %c0_40 = arith.constant 0 : index
    %c216 = arith.constant 216 : index
    %49 = vector.load %arg10[%c0_40, %c216] : memref<2x336xbf16, #tpu.memory_space<vmem>>, vector<2x24xbf16>
    %c0_41 = arith.constant 0 : index
    %c11 = arith.constant 11 : index
    %c0_42 = arith.constant 0 : index
    %50 = vector.load %arg11[%c0_41, %c11, %c0_42] : memref<2x18x24xbf16, #tpu.memory_space<vmem>>, vector<2x1x24xbf16>
    %51 = vector.shape_cast %50 : vector<2x1x24xbf16> to vector<2x24xbf16>
    %52 = vector.shape_cast %49 : vector<2x24xbf16> to vector<2x1x24xbf16>
    tpu.vector_store %arg11[%c0_41, %c11, %c0_42], %52 {strides = array<i32>} : memref<2x18x24xbf16, #tpu.memory_space<vmem>>, vector<2x1x24xbf16>,
    %c0_43 = arith.constant 0 : index
    %c240 = arith.constant 240 : index
    %53 = vector.load %arg10[%c0_43, %c240] : memref<2x336xbf16, #tpu.memory_space<vmem>>, vector<2x24xbf16>
    %c0_44 = arith.constant 0 : index
    %c12 = arith.constant 12 : index
    %c0_45 = arith.constant 0 : index
    %54 = vector.load %arg11[%c0_44, %c12, %c0_45] : memref<2x18x24xbf16, #tpu.memory_space<vmem>>, vector<2x1x24xbf16>
    %55 = vector.shape_cast %54 : vector<2x1x24xbf16> to vector<2x24xbf16>
    %56 = vector.shape_cast %53 : vector<2x24xbf16> to vector<2x1x24xbf16>
    tpu.vector_store %arg11[%c0_44, %c12, %c0_45], %56 {strides = array<i32>} : memref<2x18x24xbf16, #tpu.memory_space<vmem>>, vector<2x1x24xbf16>,
    %c0_46 = arith.constant 0 : index
    %c264 = arith.constant 264 : index
    %57 = vector.load %arg10[%c0_46, %c264] : memref<2x336xbf16, #tpu.memory_space<vmem>>, vector<2x24xbf16>
    %c0_47 = arith.constant 0 : index
    %c13 = arith.constant 13 : index
    %c0_48 = arith.constant 0 : index
    %58 = vector.load %arg11[%c0_47, %c13, %c0_48] : memref<2x18x24xbf16, #tpu.memory_space<vmem>>, vector<2x1x24xbf16>
    %59 = vector.shape_cast %58 : vector<2x1x24xbf16> to vector<2x24xbf16>
    %60 = vector.shape_cast %57 : vector<2x24xbf16> to vector<2x1x24xbf16>
    tpu.vector_store %arg11[%c0_47, %c13, %c0_48], %60 {strides = array<i32>} : memref<2x18x24xbf16, #tpu.memory_space<vmem>>, vector<2x1x24xbf16>,
    %c0_49 = arith.constant 0 : index
    %c288 = arith.constant 288 : index
    %61 = vector.load %arg10[%c0_49, %c288] : memref<2x336xbf16, #tpu.memory_space<vmem>>, vector<2x24xbf16>
    %c0_50 = arith.constant 0 : index
    %c14 = arith.constant 14 : index
    %c0_51 = arith.constant 0 : index
    %62 = vector.load %arg11[%c0_50, %c14, %c0_51] : memref<2x18x24xbf16, #tpu.memory_space<vmem>>, vector<2x1x24xbf16>
    %63 = vector.shape_cast %62 : vector<2x1x24xbf16> to vector<2x24xbf16>
    %64 = vector.shape_cast %61 : vector<2x24xbf16> to vector<2x1x24xbf16>
    tpu.vector_store %arg11[%c0_50, %c14, %c0_51], %64 {strides = array<i32>} : memref<2x18x24xbf16, #tpu.memory_space<vmem>>, vector<2x1x24xbf16>,
    %c0_52 = arith.constant 0 : index
    %c312 = arith.constant 312 : index
    %65 = vector.load %arg10[%c0_52, %c312] : memref<2x336xbf16, #tpu.memory_space<vmem>>, vector<2x24xbf16>
    %c0_53 = arith.constant 0 : index
    %c15 = arith.constant 15 : index
    %c0_54 = arith.constant 0 : index
    %66 = vector.load %arg11[%c0_53, %c15, %c0_54] : memref<2x18x24xbf16, #tpu.memory_space<vmem>>, vector<2x1x24xbf16>
    %67 = vector.shape_cast %66 : vector<2x1x24xbf16> to vector<2x24xbf16>
    %68 = vector.shape_cast %65 : vector<2x24xbf16> to vector<2x1x24xbf16>
    tpu.vector_store %arg11[%c0_53, %c15, %c0_54], %68 {strides = array<i32>} : memref<2x18x24xbf16, #tpu.memory_space<vmem>>, vector<2x1x24xbf16>,
    %c0_55 = arith.constant 0 : index
    %c0_56 = arith.constant 0 : index
    %c0_57 = arith.constant 0 : index
    %69 = vector.load %arg11[%c0_55, %c0_56, %c0_57] : memref<2x18x24xbf16, #tpu.memory_space<vmem>>, vector<2x16x24xbf16>
    %70 = vector.shape_cast %69 : vector<2x16x24xbf16> to vector<32x24xbf16>
    %c0_58 = arith.constant 0 : index
    %c0_59 = arith.constant 0 : index
    %c0_60 = arith.constant 0 : index
    %71 = vector.load %arg3[%c0_58, %c0_59, %c0_60] : memref<3x24x16xbf16, #tpu.memory_space<vmem>>, vector<1x24x16xbf16>
    %72 = vector.shape_cast %71 : vector<1x24x16xbf16> to vector<24x16xbf16>
    %cst_61 = arith.constant dense<0.000000e+00> : vector<32x16xf32>
    %73 = tpu.matmul %70, %72, %cst_61 {dimension_numbers = #tpu.dot_dimension_numbers<[1], [0], [0], [1], [0, 0, 1, 1], [], []>} : vector<32x24xbf16>, vector<24x16xbf16>, vector<32x16xf32> -> vector<32x16xf32>
    %c0_62 = arith.constant 0 : index
    %c1 = arith.constant 1 : index
    %c0_63 = arith.constant 0 : index
    %74 = vector.load %arg11[%c0_62, %c1, %c0_63] : memref<2x18x24xbf16, #tpu.memory_space<vmem>>, vector<2x16x24xbf16>
    %75 = vector.shape_cast %74 : vector<2x16x24xbf16> to vector<32x24xbf16>
    %c1_64 = arith.constant 1 : index
    %c0_65 = arith.constant 0 : index
    %c0_66 = arith.constant 0 : index
    %76 = vector.load %arg3[%c1_64, %c0_65, %c0_66] : memref<3x24x16xbf16, #tpu.memory_space<vmem>>, vector<1x24x16xbf16>
    %77 = vector.shape_cast %76 : vector<1x24x16xbf16> to vector<24x16xbf16>
    %cst_67 = arith.constant dense<0.000000e+00> : vector<32x16xf32>
    %78 = tpu.matmul %75, %77, %cst_67 {dimension_numbers = #tpu.dot_dimension_numbers<[1], [0], [0], [1], [0, 0, 1, 1], [], []>} : vector<32x24xbf16>, vector<24x16xbf16>, vector<32x16xf32> -> vector<32x16xf32>
    %79 = arith.addf %73, %78 : vector<32x16xf32>
    %c0_68 = arith.constant 0 : index
    %c2_69 = arith.constant 2 : index
    %c0_70 = arith.constant 0 : index
    %80 = vector.load %arg11[%c0_68, %c2_69, %c0_70] : memref<2x18x24xbf16, #tpu.memory_space<vmem>>, vector<2x16x24xbf16>
    %81 = vector.shape_cast %80 : vector<2x16x24xbf16> to vector<32x24xbf16>
    %c2_71 = arith.constant 2 : index
    %c0_72 = arith.constant 0 : index
    %c0_73 = arith.constant 0 : index
    %82 = vector.load %arg3[%c2_71, %c0_72, %c0_73] : memref<3x24x16xbf16, #tpu.memory_space<vmem>>, vector<1x24x16xbf16>
    %83 = vector.shape_cast %82 : vector<1x24x16xbf16> to vector<24x16xbf16>
    %cst_74 = arith.constant dense<0.000000e+00> : vector<32x16xf32>
    %84 = tpu.matmul %81, %83, %cst_74 {dimension_numbers = #tpu.dot_dimension_numbers<[1], [0], [0], [1], [0, 0, 1, 1], [], []>} : vector<32x24xbf16>, vector<24x16xbf16>, vector<32x16xf32> -> vector<32x16xf32>
    %85 = arith.addf %79, %84 : vector<32x16xf32>
    %c0_75 = arith.constant 0 : index
    %c0_76 = arith.constant 0 : index
    %86 = vector.load %arg4[%c0_75, %c0_76] : memref<1x16xf32, #tpu.memory_space<vmem>>, vector<1x16xf32>
    %87 = vector.broadcast %86 : vector<1x16xf32> to vector<32x16xf32>
    %88 = arith.addf %85, %87 : vector<32x16xf32>
    %cst_77 = arith.constant 0.000000e+00 : f32
    %89 = vector.broadcast %cst_77 : f32 to vector<32x16xf32>
    %90 = arith.maximumf %88, %89 : vector<32x16xf32>
    %91 = vector.shape_cast %90 : vector<32x16xf32> to vector<2x16x16xf32>
    %cst_78 = arith.constant 0.000000e+00 : bf16
    %92 = vector.broadcast %cst_78 : bf16 to vector<2x18x16xbf16>
    %c0_79 = arith.constant 0 : index
    %c0_80 = arith.constant 0 : index
    %c0_81 = arith.constant 0 : index
    %93 = vector.load %arg12[%c0_79, %c0_80, %c0_81] : memref<2x18x16xbf16, #tpu.memory_space<vmem>>, vector<2x18x16xbf16>
    tpu.vector_store %arg12[%c0_79, %c0_80, %c0_81], %92 {strides = array<i32>} : memref<2x18x16xbf16, #tpu.memory_space<vmem>>, vector<2x18x16xbf16>,
    %94 = arith.truncf %91 : vector<2x16x16xf32> to vector<2x16x16xbf16>
    %c0_82 = arith.constant 0 : index
    %c2_83 = arith.constant 2 : index
    %c0_84 = arith.constant 0 : index
    %95 = vector.load %arg12[%c0_82, %c2_83, %c0_84] : memref<2x18x16xbf16, #tpu.memory_space<vmem>>, vector<2x16x16xbf16>
    tpu.vector_store %arg12[%c0_82, %c2_83, %c0_84], %94 {strides = array<i32>} : memref<2x18x16xbf16, #tpu.memory_space<vmem>>, vector<2x16x16xbf16>,
    %c0_85 = arith.constant 0 : index
    %c0_86 = arith.constant 0 : index
    %c0_87 = arith.constant 0 : index
    %96 = vector.load %arg12[%c0_85, %c0_86, %c0_87] : memref<2x18x16xbf16, #tpu.memory_space<vmem>>, vector<2x16x16xbf16>
    %97 = vector.shape_cast %96 : vector<2x16x16xbf16> to vector<32x16xbf16>
    %c0_88 = arith.constant 0 : index
    %c0_89 = arith.constant 0 : index
    %c0_90 = arith.constant 0 : index
    %98 = vector.load %arg5[%c0_88, %c0_89, %c0_90] : memref<3x16x8xbf16, #tpu.memory_space<vmem>>, vector<1x16x8xbf16>
    %99 = vector.shape_cast %98 : vector<1x16x8xbf16> to vector<16x8xbf16>
    %cst_91 = arith.constant dense<0.000000e+00> : vector<32x8xf32>
    %100 = tpu.matmul %97, %99, %cst_91 {dimension_numbers = #tpu.dot_dimension_numbers<[1], [0], [0], [1], [0, 0, 1, 1], [], []>} : vector<32x16xbf16>, vector<16x8xbf16>, vector<32x8xf32> -> vector<32x8xf32>
    %c0_92 = arith.constant 0 : index
    %c1_93 = arith.constant 1 : index
    %c0_94 = arith.constant 0 : index
    %101 = vector.load %arg12[%c0_92, %c1_93, %c0_94] : memref<2x18x16xbf16, #tpu.memory_space<vmem>>, vector<2x16x16xbf16>
    %102 = vector.shape_cast %101 : vector<2x16x16xbf16> to vector<32x16xbf16>
    %c1_95 = arith.constant 1 : index
    %c0_96 = arith.constant 0 : index
    %c0_97 = arith.constant 0 : index
    %103 = vector.load %arg5[%c1_95, %c0_96, %c0_97] : memref<3x16x8xbf16, #tpu.memory_space<vmem>>, vector<1x16x8xbf16>
    %104 = vector.shape_cast %103 : vector<1x16x8xbf16> to vector<16x8xbf16>
    %cst_98 = arith.constant dense<0.000000e+00> : vector<32x8xf32>
    %105 = tpu.matmul %102, %104, %cst_98 {dimension_numbers = #tpu.dot_dimension_numbers<[1], [0], [0], [1], [0, 0, 1, 1], [], []>} : vector<32x16xbf16>, vector<16x8xbf16>, vector<32x8xf32> -> vector<32x8xf32>
    %106 = arith.addf %100, %105 : vector<32x8xf32>
    %c0_99 = arith.constant 0 : index
    %c2_100 = arith.constant 2 : index
    %c0_101 = arith.constant 0 : index
    %107 = vector.load %arg12[%c0_99, %c2_100, %c0_101] : memref<2x18x16xbf16, #tpu.memory_space<vmem>>, vector<2x16x16xbf16>
    %108 = vector.shape_cast %107 : vector<2x16x16xbf16> to vector<32x16xbf16>
    %c2_102 = arith.constant 2 : index
    %c0_103 = arith.constant 0 : index
    %c0_104 = arith.constant 0 : index
    %109 = vector.load %arg5[%c2_102, %c0_103, %c0_104] : memref<3x16x8xbf16, #tpu.memory_space<vmem>>, vector<1x16x8xbf16>
    %110 = vector.shape_cast %109 : vector<1x16x8xbf16> to vector<16x8xbf16>
    %cst_105 = arith.constant dense<0.000000e+00> : vector<32x8xf32>
    %111 = tpu.matmul %108, %110, %cst_105 {dimension_numbers = #tpu.dot_dimension_numbers<[1], [0], [0], [1], [0, 0, 1, 1], [], []>} : vector<32x16xbf16>, vector<16x8xbf16>, vector<32x8xf32> -> vector<32x8xf32>
    %112 = arith.addf %106, %111 : vector<32x8xf32>
    %c0_106 = arith.constant 0 : index
    %c0_107 = arith.constant 0 : index
    %113 = vector.load %arg6[%c0_106, %c0_107] : memref<1x8xf32, #tpu.memory_space<vmem>>, vector<1x8xf32>
    %114 = vector.broadcast %113 : vector<1x8xf32> to vector<32x8xf32>
    %115 = arith.addf %112, %114 : vector<32x8xf32>
    %cst_108 = arith.constant 0.000000e+00 : f32
    %116 = vector.broadcast %cst_108 : f32 to vector<32x8xf32>
    %117 = arith.maximumf %115, %116 : vector<32x8xf32>
    %118 = vector.shape_cast %117 : vector<32x8xf32> to vector<2x16x8xf32>
    %cst_109 = arith.constant 0.000000e+00 : bf16
    %119 = vector.broadcast %cst_109 : bf16 to vector<2x34x8xbf16>
    %c0_110 = arith.constant 0 : index
    %c0_111 = arith.constant 0 : index
    %c0_112 = arith.constant 0 : index
    %120 = vector.load %arg13[%c0_110, %c0_111, %c0_112] : memref<2x34x8xbf16, #tpu.memory_space<vmem>>, vector<2x34x8xbf16>
    tpu.vector_store %arg13[%c0_110, %c0_111, %c0_112], %119 {strides = array<i32>} : memref<2x34x8xbf16, #tpu.memory_space<vmem>>, vector<2x34x8xbf16>,
    %121 = arith.truncf %118 : vector<2x16x8xf32> to vector<2x16x8xbf16>
    %c0_113 = arith.constant 0 : index
    %c2_114 = arith.constant 2 : index
    %c0_115 = arith.constant 0 : index
    %122 = vector.load %arg13[%c0_113, %c2_114, %c0_115] : memref<2x34x8xbf16, #tpu.memory_space<vmem>>, vector<2x16x8xbf16>
    tpu.vector_store %arg13[%c0_113, %c2_114, %c0_115], %121 {strides = array<i32>} : memref<2x34x8xbf16, #tpu.memory_space<vmem>>, vector<2x16x8xbf16>,
    %c0_116 = arith.constant 0 : index
    %c0_117 = arith.constant 0 : index
    %c0_118 = arith.constant 0 : index
    %123 = vector.load %arg13[%c0_116, %c0_117, %c0_118] : memref<2x34x8xbf16, #tpu.memory_space<vmem>>, vector<2x32x8xbf16>
    %124 = vector.shape_cast %123 : vector<2x32x8xbf16> to vector<64x8xbf16>
    %c0_119 = arith.constant 0 : index
    %c0_120 = arith.constant 0 : index
    %c0_121 = arith.constant 0 : index
    %125 = vector.load %arg7[%c0_119, %c0_120, %c0_121] : memref<3x8x4xbf16, #tpu.memory_space<vmem>>, vector<1x8x4xbf16>
    %126 = vector.shape_cast %125 : vector<1x8x4xbf16> to vector<8x4xbf16>
    %cst_122 = arith.constant dense<0.000000e+00> : vector<64x4xf32>
    %127 = tpu.matmul %124, %126, %cst_122 {dimension_numbers = #tpu.dot_dimension_numbers<[1], [0], [0], [1], [0, 0, 1, 1], [], []>} : vector<64x8xbf16>, vector<8x4xbf16>, vector<64x4xf32> -> vector<64x4xf32>
    %c0_123 = arith.constant 0 : index
    %c1_124 = arith.constant 1 : index
    %c0_125 = arith.constant 0 : index
    %128 = vector.load %arg13[%c0_123, %c1_124, %c0_125] : memref<2x34x8xbf16, #tpu.memory_space<vmem>>, vector<2x32x8xbf16>
    %129 = vector.shape_cast %128 : vector<2x32x8xbf16> to vector<64x8xbf16>
    %c1_126 = arith.constant 1 : index
    %c0_127 = arith.constant 0 : index
    %c0_128 = arith.constant 0 : index
    %130 = vector.load %arg7[%c1_126, %c0_127, %c0_128] : memref<3x8x4xbf16, #tpu.memory_space<vmem>>, vector<1x8x4xbf16>
    %131 = vector.shape_cast %130 : vector<1x8x4xbf16> to vector<8x4xbf16>
    %cst_129 = arith.constant dense<0.000000e+00> : vector<64x4xf32>
    %132 = tpu.matmul %129, %131, %cst_129 {dimension_numbers = #tpu.dot_dimension_numbers<[1], [0], [0], [1], [0, 0, 1, 1], [], []>} : vector<64x8xbf16>, vector<8x4xbf16>, vector<64x4xf32> -> vector<64x4xf32>
    %133 = arith.addf %127, %132 : vector<64x4xf32>
    %c0_130 = arith.constant 0 : index
    %c2_131 = arith.constant 2 : index
    %c0_132 = arith.constant 0 : index
    %134 = vector.load %arg13[%c0_130, %c2_131, %c0_132] : memref<2x34x8xbf16, #tpu.memory_space<vmem>>, vector<2x32x8xbf16>
    %135 = vector.shape_cast %134 : vector<2x32x8xbf16> to vector<64x8xbf16>
    %c2_133 = arith.constant 2 : index
    %c0_134 = arith.constant 0 : index
    %c0_135 = arith.constant 0 : index
    %136 = vector.load %arg7[%c2_133, %c0_134, %c0_135] : memref<3x8x4xbf16, #tpu.memory_space<vmem>>, vector<1x8x4xbf16>
    %137 = vector.shape_cast %136 : vector<1x8x4xbf16> to vector<8x4xbf16>
    %cst_136 = arith.constant dense<0.000000e+00> : vector<64x4xf32>
    %138 = tpu.matmul %135, %137, %cst_136 {dimension_numbers = #tpu.dot_dimension_numbers<[1], [0], [0], [1], [0, 0, 1, 1], [], []>} : vector<64x8xbf16>, vector<8x4xbf16>, vector<64x4xf32> -> vector<64x4xf32>
    %139 = arith.addf %133, %138 : vector<64x4xf32>
    %c0_137 = arith.constant 0 : index
    %c0_138 = arith.constant 0 : index
    %140 = vector.load %arg8[%c0_137, %c0_138] : memref<1x4xf32, #tpu.memory_space<vmem>>, vector<1x4xf32>
    %141 = vector.broadcast %140 : vector<1x4xf32> to vector<64x4xf32>
    %142 = arith.addf %139, %141 : vector<64x4xf32>
    %143 = math.tanh %142 : vector<64x4xf32>
    %144 = vector.shape_cast %143 : vector<64x4xf32> to vector<2x32x4xf32>
    %145 = vector.extract_strided_slice %144 {offsets = [0, 0, 0], sizes = [2, 18, 4], strides = [1, 1, 1]} : vector<2x32x4xf32> to vector<2x18x4xf32>
    %c0_139 = arith.constant 0 : index
    %c0_140 = arith.constant 0 : index
    %c0_141 = arith.constant 0 : index
    %146 = vector.load %arg9[%c0_139, %c0_140, %c0_141] : memref<2x18x4xf32, #tpu.memory_space<vmem>>, vector<2x18x4xf32>
    tpu.vector_store %arg9[%c0_139, %c0_140, %c0_141], %145 {strides = array<i32>} : memref<2x18x4xf32, #tpu.memory_space<vmem>>, vector<2x18x4xf32>,
    return
  }
}

</mosaic_0001>

<llo_original>
// kernel: a_call__.1
$region0: #{a_call__.1}
  #allocation0 [shape = 'u32[]', space=smem, size = 0x4, offset = 0x4, fixed_abs, tag = 'smem constant byte address 0x4 - core index']
  #allocation1 [shape = 'u32[144,128]{1,0:T(1,128)}', space=vmem, size = 0x12000, scoped, tag = 'internal scratch']
  #allocation2 [shape = 'bf16[2,336]{1,0:T(2,128)(2,1)}', space=vmem, size = 0x600, scoped, tag = 'scratch operand']
  #allocation3 [shape = 'bf16[2,18,24]{2,1,0:T(8,128)(2,1)}', space=vmem, size = 0x3000, scoped, tag = 'scratch operand']
  #allocation4 [shape = 'bf16[2,18,16]{2,1,0:T(8,128)(2,1)}', space=vmem, size = 0x3000, scoped, tag = 'scratch operand']
  #allocation5 [shape = 'bf16[2,34,8]{2,1,0:T(8,128)(2,1)}', space=vmem, size = 0x5000, scoped, tag = 'scratch operand']
  %s0 = inlined_call_operand.vmem [shape: f32[2,16], index: 0, kind: input, shape index: {}]
  %s1 = inlined_call_operand.hbm [shape: bf16[16,336], index: 1, kind: input, shape index: {}]
  %s2 = inlined_call_operand.hbm [shape: f32[1,336], index: 2, kind: input, shape index: {}]
  %s3 = inlined_call_operand.hbm [shape: bf16[3,24,16], index: 3, kind: input, shape index: {}]
  %s4 = inlined_call_operand.vmem [shape: f32[1,16], index: 4, kind: input, shape index: {}]
  %s5 = inlined_call_operand.hbm [shape: bf16[3,16,8], index: 5, kind: input, shape index: {}]
  %s6 = inlined_call_operand.vmem [shape: f32[1,8], index: 6, kind: input, shape index: {}]
  %s7 = inlined_call_operand.vmem [shape: bf16[3,8,4], index: 7, kind: input, shape index: {}]
  %s8 = inlined_call_operand.vmem [shape: f32[1,4], index: 8, kind: input, shape index: {}]
  %s9 = inlined_call_operand.vmem [shape: f32[2,18,4], index: 9, kind: output, shape index: {}]
  %s10 = sld [smem:[#allocation0]]
  $region62: #{a_call__.1} parent=0
    _
  %s12 = ssub.s32 1, %s10
  %s13 = scalar_select 0, %s12, %s10
  $region1: #{a_call__.1} parent=0
    #allocation6 [shape = 'u8[12288]{0}', space=vmem, size = 0x3000, scoped, tag = 'input window, operand 1, single buffered']
    #allocation7 [shape = 's32[1]{0}', space=sflag, size = 0x4, scoped, tag = 'scoped memory for a_call__.1']
    #allocation8 [shape = 'u8[1536]{0}', space=vmem, size = 0x800, scoped, tag = 'input window, operand 2, single buffered']
    #allocation9 [shape = 's32[1]{0}', space=sflag, size = 0x4, scoped, tag = 'scoped memory for a_call__.1']
    #allocation10 [shape = 'u8[18432]{0}', space=vmem, size = 0x4800, scoped, tag = 'input window, operand 3, single buffered']
    #allocation11 [shape = 'u8[12288]{0}', space=vmem, size = 0x3000, scoped, tag = 'input window, operand 5, single buffered']
    #allocation12 [shape = 's32[1]{0}', space=sflag, size = 0x4, scoped, tag = 'scoped memory for a_call__.1']
    %14 = vsyncpa [#allocation7], 0
    %15 = vsyncpa [#allocation9], 0
    %16 = vsyncpa [#allocation12], 0
    // Predicated region
    $region2: #{a_call__.1} parent=1 // pred_check
      _
    $region3: #{a_call__.1} parent=1 // pred_check_branch
      %18 = sbr.rel (0) target = $region5
    $region4: #{a_call__.1} parent=1 // pred_region
      _
    $region5: #{a_call__.1} parent=1 // pred_fallthru
      _
    // Predicated region
    $region6: #{a_call__.1} parent=1 // pred_check
      _
    $region7: #{a_call__.1} parent=1 // pred_check_branch
      %20 = sbr.rel (0) target = $region9
    $region8: #{a_call__.1} parent=1 // pred_region
      %s22 = ssub.s32 384, 384
      %23 = vsyncadd [#allocation7], %s22
      %s24 = sshll.u32 [#allocation6], 4
      %s25 = int_to_ptr.vmem [resolvable:$true] %s24
      %30 = dma.hbm_to_vmem [thread:$0]  %s1, 384, %s25, [#allocation7], 192, 192, 12
    $region9: #{a_call__.1} parent=1 // pred_fallthru
      _
    // Predicated region
    $region10: #{a_call__.1} parent=1 // pred_check
      _
    $region11: #{a_call__.1} parent=1 // pred_check_branch
      %32 = sbr.rel (0) target = $region13
    $region12: #{a_call__.1} parent=1 // pred_region
      %s34 = ssub.s32 48, 48
      %35 = vsyncadd [#allocation9], %s34
      %s37 = sshll.u32 [#allocation8], 4
      %s38 = int_to_ptr.vmem [resolvable:$true] %s37
      %40 = dma.hbm_to_vmem [thread:$0]  %s2, 48, %s38, [#allocation9]
    $region13: #{a_call__.1} parent=1 // pred_fallthru
      _
    // Predicated region
    $region14: #{a_call__.1} parent=1 // pred_check
      _
    $region15: #{a_call__.1} parent=1 // pred_check_branch
      %42 = sbr.rel (0) target = $region17
    $region16: #{a_call__.1} parent=1 // pred_region
      %s44 = ssub.s32 576, 576
      %45 = vsyncadd [#allocation9], %s44
      %s46 = sshll.u32 [#allocation10], 4
      %s47 = int_to_ptr.vmem [resolvable:$true] %s46
      %52 = dma.hbm_to_vmem [thread:$0]  %s3, 576, %s47, [#allocation9], 64, 64, 4
    $region17: #{a_call__.1} parent=1 // pred_fallthru
      _
    // Predicated region
    $region18: #{a_call__.1} parent=1 // pred_check
      _
    $region19: #{a_call__.1} parent=1 // pred_check_branch
      %54 = sbr.rel (0) target = $region21
    $region20: #{a_call__.1} parent=1 // pred_region
      _
    $region21: #{a_call__.1} parent=1 // pred_fallthru
      _
    // Predicated region
    $region22: #{a_call__.1} parent=1 // pred_check
      _
    $region23: #{a_call__.1} parent=1 // pred_check_branch
      %56 = sbr.rel (0) target = $region25
    $region24: #{a_call__.1} parent=1 // pred_region
      %s58 = ssub.s32 384, 384
      %59 = vsyncadd [#allocation12], %s58
      %s60 = sshll.u32 [#allocation11], 4
      %s61 = int_to_ptr.vmem [resolvable:$true] %s60
      %66 = dma.hbm_to_vmem [thread:$0]  %s5, 384, %s61, [#allocation12], 64, 64, 4
    $region25: #{a_call__.1} parent=1 // pred_fallthru
      _
    // Predicated region
    $region26: #{a_call__.1} parent=1 // pred_check
      _
    $region27: #{a_call__.1} parent=1 // pred_check_branch
      %68 = sbr.rel (0) target = $region29
    $region28: #{a_call__.1} parent=1 // pred_region
      _
    $region29: #{a_call__.1} parent=1 // pred_fallthru
      _
    // Predicated region
    $region30: #{a_call__.1} parent=1 // pred_check
      _
    $region31: #{a_call__.1} parent=1 // pred_check_branch
      %70 = sbr.rel (0) target = $region33
    $region32: #{a_call__.1} parent=1 // pred_region
      _
    $region33: #{a_call__.1} parent=1 // pred_fallthru
      _
    // Predicated region
    $region34: #{a_call__.1} parent=1 // pred_check
      _
    $region35: #{a_call__.1} parent=1 // pred_check_branch
      %72 = sbr.rel (0) target = $region37
    $region36: #{a_call__.1} parent=1 // pred_region
      _
    $region37: #{a_call__.1} parent=1 // pred_fallthru
      _
    // Predicated region
    $region38: #{a_call__.1} parent=1 // pred_check
      _
    $region39: #{a_call__.1} parent=1 // pred_check_branch
      %74 = sbr.rel (0) target = $region41
    $region40: #{a_call__.1} parent=1 // pred_region
      %75 = dma.done [#allocation7], 384
    $region41: #{a_call__.1} parent=1 // pred_fallthru
      _
    // Predicated region
    $region42: #{a_call__.1} parent=1 // pred_check
      _
    $region43: #{a_call__.1} parent=1 // pred_check_branch
      %77 = sbr.rel (0) target = $region45
    $region44: #{a_call__.1} parent=1 // pred_region
      %78 = dma.done [#allocation9], 48
    $region45: #{a_call__.1} parent=1 // pred_fallthru
      _
    // Predicated region
    $region46: #{a_call__.1} parent=1 // pred_check
      _
    $region47: #{a_call__.1} parent=1 // pred_check_branch
      %80 = sbr.rel (0) target = $region49
    $region48: #{a_call__.1} parent=1 // pred_region
      %81 = dma.done [#allocation9], 576
    $region49: #{a_call__.1} parent=1 // pred_fallthru
      _
    // Predicated region
    $region50: #{a_call__.1} parent=1 // pred_check
      _
    $region51: #{a_call__.1} parent=1 // pred_check_branch
      %83 = sbr.rel (0) target = $region53
    $region52: #{a_call__.1} parent=1 // pred_region
      %84 = dma.done [#allocation12], 384
    $region53: #{a_call__.1} parent=1 // pred_fallthru
      _
    %v86 = vld [vmem:[%s0] sm:$0x3]
    %v87 = vpack.c.bf16 %v86, %v86
    %v88 = vld [vmem:[#allocation6] sm:$0xff]
    %v89 = vld [vmem:[#allocation6 + $0x8] sm:$0xf]
    %v90 = vld [vmem:[#allocation6 + $0xc] sm:$0xff]
    %v91 = vld [vmem:[#allocation6 + $0x14] sm:$0xf]
    %v92 = vld [vmem:[#allocation8] sm:$0x7]
    %v94 = vlaneseq
    %v95 = vshrl.u32 %v94, 7
    %v96 = vsub.s32 0, %v95
    %v97 = vrot.slane %v92, %v96
    %v98 = vlaneseq
    %v99 = vshrl.u32 %v98, 7
    %v100 = vsub.s32 1, %v99
    %v101 = vrot.slane %v92, %v100
    %v102 = vlaneseq
    %v103 = vshrl.u32 %v102, 7
    %v104 = vsub.s32 2, %v103
    %v105 = vrot.slane %v92, %v104
    %v113 = vunpack.c.l.b16 %v88
    %v114 = vunpack.c.h.b16 %v88
    %v115 = vunpack.c.l.b16 %v89
    %v116 = vunpack.c.l.b16 %v90
    %v117 = vunpack.c.h.b16 %v90
    %v118 = vunpack.c.l.b16 %v91
    %v119 = vpack.c.b16 %v116, %v113
    %v120 = vpack.c.b16 %v117, %v114
    %v121 = vpack.c.b16 %v118, %v115
    %vm125 = vcmask 130048
    %v127 = vsel %vm125, %v87, 0
    %129 = vmatprep.subr.bf16.mxu0 0
    %130 = vmatpush1.bf16.msra.mxu0 0
    %131 = vmatprep.subr.bf16.mxu0 0
    %132 = vmatpush1.bf16.msra.mxu0 0
    %133 = vmatprep.subr.bf16.mxu0 0
    %134 = vmatpush1.bf16.msra.mxu0 0
    %135 = vmatprep.subr.bf16.mxu0 0
    %136 = vmatpush1.bf16.msra.mxu0 0
    %137 = vmatprep.subr.bf16.mxu0 0
    %138 = vmatpush1.bf16.msra.mxu0 0
    %139 = vmatprep.subr.bf16.mxu0 0
    %140 = vmatpush1.bf16.msra.mxu0 0
    %141 = vmatprep.subr.bf16.mxu0 0
    %142 = vmatpush1.bf16.msra.mxu0 0
    %143 = vmatprep.subr.bf16.mxu0 %v120
    %144 = vmatpush1.bf16.msra.mxu0 %v119
    %145 = vmatprep.subr.bf16.mxu0 0
    %146 = vmatpush2.bf16.msra.mxu0 0
    %147 = vmatprep.subr.bf16.mxu0 0
    %148 = vmatpush2.bf16.msra.mxu0 0
    %149 = vmatprep.subr.bf16.mxu0 0
    %150 = vmatpush2.bf16.msra.mxu0 0
    %151 = vmatprep.subr.bf16.mxu0 0
    %152 = vmatpush2.bf16.msra.mxu0 0
    %153 = vmatprep.subr.bf16.mxu0 0
    %154 = vmatpush2.bf16.msra.mxu0 0
    %155 = vmatprep.subr.bf16.mxu0 0
    %156 = vmatpush2.bf16.msra.mxu0 0
    %157 = vmatprep.subr.bf16.mxu0 0
    %158 = vmatpush2.bf16.msra.mxu0 0
    %159 = vmatprep.subr.bf16.mxu0 0
    %160 = vmatpush2.bf16.msra.mxu0 0
    %161 = vmatprep.mubr.bf16.mxu0 0
    %162 = vmatmul.mubr.bf16.gmra.mxu0 %v127
    %v163 = vpop.f32.mrf.mxu0
    %v164 = vadd.f32 %v97, %v163
    %v165 = vpop.f32.mrf.mxu0
    %v166 = vadd.f32 %v101, %v165
    %v167 = vpop.f32.mrf.mxu0
    %v168 = vpop.f32.mrf.mxu0
    %169 = vdwg.mxu0
    %170 = vmatprep.subr.bf16.mxu0 0
    %171 = vmatpush1.bf16.msra.mxu0 0
    %172 = vmatprep.subr.bf16.mxu0 0
    %173 = vmatpush1.bf16.msra.mxu0 0
    %174 = vmatprep.subr.bf16.mxu0 0
    %175 = vmatpush1.bf16.msra.mxu0 0
    %176 = vmatprep.subr.bf16.mxu0 0
    %177 = vmatpush1.bf16.msra.mxu0 0
    %178 = vmatprep.subr.bf16.mxu0 0
    %179 = vmatpush1.bf16.msra.mxu0 0
    %180 = vmatprep.subr.bf16.mxu0 0
    %181 = vmatpush1.bf16.msra.mxu0 0
    %182 = vmatprep.subr.bf16.mxu0 0
    %183 = vmatpush1.bf16.msra.mxu0 0
    %184 = vmatprep.subr.bf16.mxu0 0
    %185 = vmatpush1.bf16.msra.mxu0 %v121
    %186 = vmatprep.subr.bf16.mxu0 0
    %187 = vmatpush2.bf16.msra.mxu0 0
    %188 = vmatprep.subr.bf16.mxu0 0
    %189 = vmatpush2.bf16.msra.mxu0 0
    %190 = vmatprep.subr.bf16.mxu0 0
    %191 = vmatpush2.bf16.msra.mxu0 0
    %192 = vmatprep.subr.bf16.mxu0 0
    %193 = vmatpush2.bf16.msra.mxu0 0
    %194 = vmatprep.subr.bf16.mxu0 0
    %195 = vmatpush2.bf16.msra.mxu0 0
    %196 = vmatprep.subr.bf16.mxu0 0
    %197 = vmatpush2.bf16.msra.mxu0 0
    %198 = vmatprep.subr.bf16.mxu0 0
    %199 = vmatpush2.bf16.msra.mxu0 0
    %200 = vmatprep.subr.bf16.mxu0 0
    %201 = vmatpush2.bf16.msra.mxu0 0
    %202 = vmatprep.mubr.bf16.mxu0 0
    %203 = vmatmul.mubr.bf16.gmra.mxu0 %v127
    %v204 = vpop.f32.mrf.mxu0
    %v205 = vadd.f32 %v105, %v204
    %v206 = vpop.f32.mrf.mxu0
    %v207 = vpop.f32.mrf.mxu0
    %v208 = vpop.f32.mrf.mxu0
    %209 = vdwg.mxu0
    %v210 = vmax.f32 %v164, 0.0
    %v211 = vmax.f32 %v166, 0.0
    %v212 = vmax.f32 %v205, 0.0
    %v213 = vpack.c.bf16 %v210, %v210
    %v214 = vpack.c.bf16 %v211, %v211
    %v215 = vpack.c.bf16 %v212, %v212
    %v219 = vcombine.low %v213, %v214
    %v221 = vunpack.c.l.s4 1966171168
    %v222 = vunpack.c.0.s8 %v221
    %v223 = vlaneseq
    %v224 = vshrl.u32 %v223, 7
    %v225 = vsub.s32 %v222, %v224
    %v226 = vrot.slane %v219, %v225
    %v228 = vunpack.c.l.s4 1966171168
    %v229 = vunpack.c.0.s8 %v228
    %v230 = vlaneseq
    %v231 = vshrl.u32 %v230, 7
    %v232 = vsub.s32 %v229, %v231
    %v233 = vrot.slane %v215, %v232
    %v234 = vcombine.low %v226, %v233
    %v236 = vunpack.c.l.s4 1966171168
    %v237 = vunpack.c.0.s8 %v236
    %v238 = vlaneseq
    %v239 = vshrl.u32 %v238, 7
    %v240 = vsub.s32 %v237, %v239
    %v241 = vrot.slane %v234, %v240
    %vm243 = vcmask 1040384
    %vm244 = vcmask 1041409
    %vm245 = vmor %vm244, %vm243
    %vm246 = vcmask 649218
    %vm247 = vmor %vm246, %vm245
    %248 = vst.msk [vmem:[#allocation2] sm:$0x7] %vm247, %v241
    %vm249 = vcmask 191488
    %250 = vst.msk [vmem:[#allocation3] sm:$0xf] %vm249, 0
    %251 = vst.msk [vmem:[#allocation3 + $0x4] sm:$0xf] %vm249, 0
    %vm252 = vcmask 188416
    %253 = vst.msk [vmem:[#allocation3 + $0x8] sm:$0x1] %vm252, 0
    %254 = vst.msk [vmem:[#allocation3 + $0xc] sm:$0xf] %vm249, 0
    %255 = vst.msk [vmem:[#allocation3 + $0x10] sm:$0xf] %vm249, 0
    %256 = vst.msk [vmem:[#allocation3 + $0x14] sm:$0x1] %vm252, 0
    %v257 = vld [vmem:[#allocation2] sm:$0x1]
    %v259 = vunpack.i.l.s16 %v257
    %v260 = vunpack.i.h.s16 %v257
    %v261 = vpack.i.b16 %v259, %v259
    %v262 = vpack.i.b16 %v260, %v260
    %v264 = vunpack.c.l.s4 286326784
    %v265 = vunpack.c.0.s8 %v264
    %v266 = vlaneseq
    %v267 = vshrl.u32 %v266, 7
    %v268 = vsub.s32 %v265, %v267
    %v269 = vrot.slane %v261, %v268
    %v271 = vunpack.c.l.s4 286326784
    %v272 = vunpack.c.0.s8 %v271
    %v273 = vlaneseq
    %v274 = vshrl.u32 %v273, 7
    %v275 = vsub.s32 %v272, %v274
    %v276 = vrot.slane %v262, %v275
    %vm279 = vcmask 189441
    %vm280 = vsmask.f32 1280
    %vm281 = vmand %vm279, %vm280
    %v282 = vld [vmem:[#allocation3] sm:$0x2]
    %v283 = vsel %vm281, %v269, %v282
    %284 = vst [vmem:[#allocation3] sm:$0x2] %v283
    %v285 = vld [vmem:[#allocation3 + $0xc] sm:$0x2]
    %v286 = vsel %vm281, %v276, %v285
    %287 = vst [vmem:[#allocation3 + $0xc] sm:$0x2] %v286
    %v288 = vld [vmem:[#allocation2] sm:$0x1]
    %v290 = vunpack.i.l.s16 %v288
    %v291 = vunpack.i.h.s16 %v288
    %v292 = vpack.i.b16 %v290, %v290
    %v293 = vpack.i.b16 %v291, %v291
    %v295 = vunpack.c.l.s4 286326784
    %v296 = vunpack.c.0.s8 %v295
    %v297 = vlaneseq
    %v298 = vshrl.u32 %v297, 7
    %v299 = vsub.s32 %v296, %v298
    %v300 = vrot.slane %v292, %v299
    %v302 = vunpack.c.l.s4 286326784
    %v303 = vunpack.c.0.s8 %v302
    %v304 = vlaneseq
    %v305 = vshrl.u32 %v304, 7
    %v306 = vsub.s32 %v303, %v305
    %v307 = vrot.slane %v293, %v306
    %308 = vrot.lane.b32.xlu0 %v300, 104
    %v309 = vpop.permute.xlu0 %308
    %310 = vrot.lane.b32.xlu0 %v307, 104
    %v311 = vpop.permute.xlu0 %310
    %vm314 = vsmask.f32 7942
    %vm315 = vmand %vm279, %vm314
    %v316 = vld [vmem:[#allocation3] sm:$0x2]
    %v317 = vsel %vm315, %v309, %v316
    %318 = vst [vmem:[#allocation3] sm:$0x2] %v317
    %v319 = vld [vmem:[#allocation3 + $0xc] sm:$0x2]
    %v320 = vsel %vm315, %v311, %v319
    %321 = vst [vmem:[#allocation3 + $0xc] sm:$0x2] %v320
    %v322 = vld [vmem:[#allocation2] sm:$0x1]
    %v324 = vunpack.i.l.s16 %v322
    %v325 = vunpack.i.h.s16 %v322
    %v326 = vpack.i.b16 %v324, %v324
    %v327 = vpack.i.b16 %v325, %v325
    %v329 = vunpack.c.l.s4 286326784
    %v330 = vunpack.c.0.s8 %v329
    %v331 = vlaneseq
    %v332 = vshrl.u32 %v331, 7
    %v333 = vsub.s32 %v330, %v332
    %v334 = vrot.slane %v326, %v333
    %v336 = vunpack.c.l.s4 286326784
    %v337 = vunpack.c.0.s8 %v336
    %v338 = vlaneseq
    %v339 = vshrl.u32 %v338, 7
    %v340 = vsub.s32 %v337, %v339
    %v341 = vrot.slane %v327, %v340
    %342 = vrot.lane.b32.xlu0 %v334, 80
    %v343 = vpop.permute.xlu0 %342
    %344 = vrot.lane.b32.xlu0 %v341, 80
    %v345 = vpop.permute.xlu0 %344
    %vm348 = vcmask 190466
    %vm349 = vsmask.f32 2304
    %vm350 = vmand %vm348, %vm349
    %v351 = vld [vmem:[#allocation3] sm:$0x4]
    %v352 = vsel %vm350, %v343, %v351
    %353 = vst [vmem:[#allocation3] sm:$0x4] %v352
    %v354 = vld [vmem:[#allocation3 + $0xc] sm:$0x4]
    %v355 = vsel %vm350, %v345, %v354
    %356 = vst [vmem:[#allocation3 + $0xc] sm:$0x4] %v355
    %v357 = vld [vmem:[#allocation2] sm:$0x1]
    %v359 = vunpack.i.l.s16 %v357
    %v360 = vunpack.i.h.s16 %v357
    %v361 = vpack.i.b16 %v359, %v359
    %v362 = vpack.i.b16 %v360, %v360
    %v364 = vunpack.c.l.s4 286326784
    %v365 = vunpack.c.0.s8 %v364
    %v366 = vlaneseq
    %v367 = vshrl.u32 %v366, 7
    %v368 = vsub.s32 %v365, %v367
    %v369 = vrot.slane %v361, %v368
    %v371 = vunpack.c.l.s4 286326784
    %v372 = vunpack.c.0.s8 %v371
    %v373 = vlaneseq
    %v374 = vshrl.u32 %v373, 7
    %v375 = vsub.s32 %v372, %v374
    %v376 = vrot.slane %v362, %v375
    %377 = vrot.lane.b32.xlu0 %v369, 56
    %v378 = vpop.permute.xlu0 %377
    %379 = vrot.lane.b32.xlu0 %v376, 56
    %v380 = vpop.permute.xlu0 %379
    %vm383 = vsmask.f32 7946
    %vm384 = vmand %vm348, %vm383
    %v385 = vld [vmem:[#allocation3] sm:$0x4]
    %v386 = vsel %vm384, %v378, %v385
    %387 = vst [vmem:[#allocation3] sm:$0x4] %v386
    %v388 = vld [vmem:[#allocation3 + $0xc] sm:$0x4]
    %v389 = vsel %vm384, %v380, %v388
    %390 = vst [vmem:[#allocation3 + $0xc] sm:$0x4] %v389
    %v391 = vld [vmem:[#allocation2] sm:$0x1]
    %v393 = vunpack.i.l.s16 %v391
    %v394 = vunpack.i.h.s16 %v391
    %v395 = vpack.i.b16 %v393, %v393
    %v396 = vpack.i.b16 %v394, %v394
    %v398 = vunpack.c.l.s4 286326784
    %v399 = vunpack.c.0.s8 %v398
    %v400 = vlaneseq
    %v401 = vshrl.u32 %v400, 7
    %v402 = vsub.s32 %v399, %v401
    %v403 = vrot.slane %v395, %v402
    %v405 = vunpack.c.l.s4 286326784
    %v406 = vunpack.c.0.s8 %v405
    %v407 = vlaneseq
    %v408 = vshrl.u32 %v407, 7
    %v409 = vsub.s32 %v406, %v408
    %v410 = vrot.slane %v396, %v409
    %411 = vrot.lane.b32.xlu0 %v403, 32
    %v412 = vpop.permute.xlu0 %411
    %413 = vrot.lane.b32.xlu0 %v410, 32
    %v414 = vpop.permute.xlu0 %413
    %vm417 = vcmask 191491
    %vm418 = vsmask.f32 3328
    %vm419 = vmand %vm417, %vm418
    %v420 = vld [vmem:[#allocation3] sm:$0x8]
    %v421 = vsel %vm419, %v412, %v420
    %422 = vst [vmem:[#allocation3] sm:$0x8] %v421
    %v423 = vld [vmem:[#allocation3 + $0xc] sm:$0x8]
    %v424 = vsel %vm419, %v414, %v423
    %425 = vst [vmem:[#allocation3 + $0xc] sm:$0x8] %v424
    %v426 = vld [vmem:[#allocation2] sm:$0x3]
    %v428 = vunpack.i.l.s16 %v426
    %v429 = vunpack.i.h.s16 %v426
    %v430 = vpack.i.b16 %v428, %v428
    %v431 = vpack.i.b16 %v429, %v429
    %v433 = vunpack.c.l.s4 286326784
    %v434 = vunpack.c.0.s8 %v433
    %v435 = vlaneseq
    %v436 = vshrl.u32 %v435, 7
    %v437 = vsub.s32 %v434, %v436
    %v438 = vrot.slane %v430, %v437
    %v440 = vunpack.c.l.s4 286326784
    %v441 = vunpack.c.0.s8 %v440
    %v442 = vlaneseq
    %v443 = vshrl.u32 %v442, 7
    %v444 = vsub.s32 %v441, %v443
    %v445 = vrot.slane %v431, %v444
    %446 = vrot.lane.b32.xlu0 %v438, 8
    %v447 = vpop.permute.xlu0 %446
    %448 = vrot.lane.b32.xlu0 %v445, 8
    %v449 = vpop.permute.xlu0 %448
    %v450 = vrot.slane %v447, 4
    %v451 = vrot.slane %v449, 4
    %vm452 = vcmask 64512
    %v453 = vsel %vm452, %v447, %v450
    %v454 = vsel %vm452, %v449, %v451
    %vm457 = vsmask.f32 7950
    %vm458 = vmand %vm417, %vm457
    %v459 = vld [vmem:[#allocation3] sm:$0x8]
    %v460 = vsel %vm458, %v453, %v459
    %461 = vst [vmem:[#allocation3] sm:$0x8] %v460
    %v462 = vld [vmem:[#allocation3 + $0xc] sm:$0x8]
    %v463 = vsel %vm458, %v454, %v462
    %464 = vst [vmem:[#allocation3 + $0xc] sm:$0x8] %v463
    %v465 = vld [vmem:[#allocation2 + $0x1] sm:$0x1]
    %v467 = vunpack.i.l.s16 %v465
    %v468 = vunpack.i.h.s16 %v465
    %v469 = vpack.i.b16 %v467, %v467
    %v470 = vpack.i.b16 %v468, %v468
    %v472 = vunpack.c.l.s4 286326784
    %v473 = vunpack.c.0.s8 %v472
    %v474 = vlaneseq
    %v475 = vshrl.u32 %v474, 7
    %v476 = vsub.s32 %v473, %v475
    %v477 = vrot.slane %v469, %v476
    %v479 = vunpack.c.l.s4 286326784
    %v480 = vunpack.c.0.s8 %v479
    %v481 = vlaneseq
    %v482 = vshrl.u32 %v481, 7
    %v483 = vsub.s32 %v480, %v482
    %v484 = vrot.slane %v470, %v483
    %485 = vrot.lane.b32.xlu0 %v477, 112
    %v486 = vpop.permute.xlu0 %485
    %487 = vrot.lane.b32.xlu0 %v484, 112
    %v488 = vpop.permute.xlu0 %487
    %vm491 = vcmask 188416
    %vm492 = vsmask.f32 256
    %vm493 = vmand %vm491, %vm492
    %v494 = vld [vmem:[#allocation3 + $0x4] sm:$0x1]
    %v495 = vsel %vm493, %v486, %v494
    %496 = vst [vmem:[#allocation3 + $0x4] sm:$0x1] %v495
    %v497 = vld [vmem:[#allocation3 + $0x10] sm:$0x1]
    %v498 = vsel %vm493, %v488, %v497
    %499 = vst [vmem:[#allocation3 + $0x10] sm:$0x1] %v498
    %v500 = vld [vmem:[#allocation2 + $0x1] sm:$0x1]
    %v502 = vunpack.i.l.s16 %v500
    %v503 = vunpack.i.h.s16 %v500
    %v504 = vpack.i.b16 %v502, %v502
    %v505 = vpack.i.b16 %v503, %v503
    %v507 = vunpack.c.l.s4 286326784
    %v508 = vunpack.c.0.s8 %v507
    %v509 = vlaneseq
    %v510 = vshrl.u32 %v509, 7
    %v511 = vsub.s32 %v508, %v510
    %v512 = vrot.slane %v504, %v511
    %v514 = vunpack.c.l.s4 286326784
    %v515 = vunpack.c.0.s8 %v514
    %v516 = vlaneseq
    %v517 = vshrl.u32 %v516, 7
    %v518 = vsub.s32 %v515, %v517
    %v519 = vrot.slane %v505, %v518
    %520 = vrot.lane.b32.xlu0 %v512, 88
    %v521 = vpop.permute.xlu0 %520
    %522 = vrot.lane.b32.xlu0 %v519, 88
    %v523 = vpop.permute.xlu0 %522
    %vm526 = vsmask.f32 7938
    %vm527 = vmand %vm491, %vm526
    %v528 = vld [vmem:[#allocation3 + $0x4] sm:$0x1]
    %v529 = vsel %vm527, %v521, %v528
    %530 = vst [vmem:[#allocation3 + $0x4] sm:$0x1] %v529
    %v531 = vld [vmem:[#allocation3 + $0x10] sm:$0x1]
    %v532 = vsel %vm527, %v523, %v531
    %533 = vst [vmem:[#allocation3 + $0x10] sm:$0x1] %v532
    %v534 = vld [vmem:[#allocation2 + $0x1] sm:$0x1]
    %v536 = vunpack.i.l.s16 %v534
    %v537 = vunpack.i.h.s16 %v534
    %v538 = vpack.i.b16 %v536, %v536
    %v539 = vpack.i.b16 %v537, %v537
    %v541 = vunpack.c.l.s4 286326784
    %v542 = vunpack.c.0.s8 %v541
    %v543 = vlaneseq
    %v544 = vshrl.u32 %v543, 7
    %v545 = vsub.s32 %v542, %v544
    %v546 = vrot.slane %v538, %v545
    %v548 = vunpack.c.l.s4 286326784
    %v549 = vunpack.c.0.s8 %v548
    %v550 = vlaneseq
    %v551 = vshrl.u32 %v550, 7
    %v552 = vsub.s32 %v549, %v551
    %v553 = vrot.slane %v539, %v552
    %554 = vrot.lane.b32.xlu0 %v546, 64
    %v555 = vpop.permute.xlu0 %554
    %556 = vrot.lane.b32.xlu0 %v553, 64
    %v557 = vpop.permute.xlu0 %556
    %v560 = vld [vmem:[#allocation3 + $0x4] sm:$0x2]
    %v561 = vsel %vm281, %v555, %v560
    %562 = vst [vmem:[#allocation3 + $0x4] sm:$0x2] %v561
    %v563 = vld [vmem:[#allocation3 + $0x10] sm:$0x2]
    %v564 = vsel %vm281, %v557, %v563
    %565 = vst [vmem:[#allocation3 + $0x10] sm:$0x2] %v564
    %v566 = vld [vmem:[#allocation2 + $0x1] sm:$0x1]
    %v568 = vunpack.i.l.s16 %v566
    %v569 = vunpack.i.h.s16 %v566
    %v570 = vpack.i.b16 %v568, %v568
    %v571 = vpack.i.b16 %v569, %v569
    %v573 = vunpack.c.l.s4 286326784
    %v574 = vunpack.c.0.s8 %v573
    %v575 = vlaneseq
    %v576 = vshrl.u32 %v575, 7
    %v577 = vsub.s32 %v574, %v576
    %v578 = vrot.slane %v570, %v577
    %v580 = vunpack.c.l.s4 286326784
    %v581 = vunpack.c.0.s8 %v580
    %v582 = vlaneseq
    %v583 = vshrl.u32 %v582, 7
    %v584 = vsub.s32 %v581, %v583
    %v585 = vrot.slane %v571, %v584
    %586 = vrot.lane.b32.xlu0 %v578, 40
    %v587 = vpop.permute.xlu0 %586
    %588 = vrot.lane.b32.xlu0 %v585, 40
    %v589 = vpop.permute.xlu0 %588
    %v592 = vld [vmem:[#allocation3 + $0x4] sm:$0x2]
    %v593 = vsel %vm315, %v587, %v592
    %594 = vst [vmem:[#allocation3 + $0x4] sm:$0x2] %v593
    %v595 = vld [vmem:[#allocation3 + $0x10] sm:$0x2]
    %v596 = vsel %vm315, %v589, %v595
    %597 = vst [vmem:[#allocation3 + $0x10] sm:$0x2] %v596
    %v598 = vld [vmem:[#allocation2 + $0x1] sm:$0x3]
    %v600 = vunpack.i.l.s16 %v598
    %v601 = vunpack.i.h.s16 %v598
    %v602 = vpack.i.b16 %v600, %v600
    %v603 = vpack.i.b16 %v601, %v601
    %v605 = vunpack.c.l.s4 286326784
    %v606 = vunpack.c.0.s8 %v605
    %v607 = vlaneseq
    %v608 = vshrl.u32 %v607, 7
    %v609 = vsub.s32 %v606, %v608
    %v610 = vrot.slane %v602, %v609
    %v612 = vunpack.c.l.s4 286326784
    %v613 = vunpack.c.0.s8 %v612
    %v614 = vlaneseq
    %v615 = vshrl.u32 %v614, 7
    %v616 = vsub.s32 %v613, %v615
    %v617 = vrot.slane %v603, %v616
    %618 = vrot.lane.b32.xlu0 %v610, 16
    %v619 = vpop.permute.xlu0 %618
    %620 = vrot.lane.b32.xlu0 %v617, 16
    %v621 = vpop.permute.xlu0 %620
    %v622 = vrot.slane %v619, 4
    %v623 = vrot.slane %v621, 4
    %vm624 = vcmask 130048
    %v625 = vsel %vm624, %v619, %v622
    %v626 = vsel %vm624, %v621, %v623
    %v629 = vld [vmem:[#allocation3 + $0x4] sm:$0x4]
    %v630 = vsel %vm350, %v625, %v629
    %631 = vst [vmem:[#allocation3 + $0x4] sm:$0x4] %v630
    %v632 = vld [vmem:[#allocation3 + $0x10] sm:$0x4]
    %v633 = vsel %vm350, %v626, %v632
    %634 = vst [vmem:[#allocation3 + $0x10] sm:$0x4] %v633
    %v635 = vld [vmem:[#allocation2 + $0x2] sm:$0x1]
    %v637 = vunpack.i.l.s16 %v635
    %v638 = vunpack.i.h.s16 %v635
    %v639 = vpack.i.b16 %v637, %v637
    %v640 = vpack.i.b16 %v638, %v638
    %v642 = vunpack.c.l.s4 286326784
    %v643 = vunpack.c.0.s8 %v642
    %v644 = vlaneseq
    %v645 = vshrl.u32 %v644, 7
    %v646 = vsub.s32 %v643, %v645
    %v647 = vrot.slane %v639, %v646
    %v649 = vunpack.c.l.s4 286326784
    %v650 = vunpack.c.0.s8 %v649
    %v651 = vlaneseq
    %v652 = vshrl.u32 %v651, 7
    %v653 = vsub.s32 %v650, %v652
    %v654 = vrot.slane %v640, %v653
    %655 = vrot.lane.b32.xlu0 %v647, 120
    %v656 = vpop.permute.xlu0 %655
    %657 = vrot.lane.b32.xlu0 %v654, 120
    %v658 = vpop.permute.xlu0 %657
    %v661 = vld [vmem:[#allocation3 + $0x4] sm:$0x4]
    %v662 = vsel %vm384, %v656, %v661
    %663 = vst [vmem:[#allocation3 + $0x4] sm:$0x4] %v662
    %v664 = vld [vmem:[#allocation3 + $0x10] sm:$0x4]
    %v665 = vsel %vm384, %v658, %v664
    %666 = vst [vmem:[#allocation3 + $0x10] sm:$0x4] %v665
    %v667 = vld [vmem:[#allocation2 + $0x2] sm:$0x1]
    %v669 = vunpack.i.l.s16 %v667
    %v670 = vunpack.i.h.s16 %v667
    %v671 = vpack.i.b16 %v669, %v669
    %v672 = vpack.i.b16 %v670, %v670
    %v674 = vunpack.c.l.s4 286326784
    %v675 = vunpack.c.0.s8 %v674
    %v676 = vlaneseq
    %v677 = vshrl.u32 %v676, 7
    %v678 = vsub.s32 %v675, %v677
    %v679 = vrot.slane %v671, %v678
    %v681 = vunpack.c.l.s4 286326784
    %v682 = vunpack.c.0.s8 %v681
    %v683 = vlaneseq
    %v684 = vshrl.u32 %v683, 7
    %v685 = vsub.s32 %v682, %v684
    %v686 = vrot.slane %v672, %v685
    %687 = vrot.lane.b32.xlu0 %v679, 96
    %v688 = vpop.permute.xlu0 %687
    %689 = vrot.lane.b32.xlu0 %v686, 96
    %v690 = vpop.permute.xlu0 %689
    %v693 = vld [vmem:[#allocation3 + $0x4] sm:$0x8]
    %v694 = vsel %vm419, %v688, %v693
    %695 = vst [vmem:[#allocation3 + $0x4] sm:$0x8] %v694
    %v696 = vld [vmem:[#allocation3 + $0x10] sm:$0x8]
    %v697 = vsel %vm419, %v690, %v696
    %698 = vst [vmem:[#allocation3 + $0x10] sm:$0x8] %v697
    %v699 = vld [vmem:[#allocation2 + $0x2] sm:$0x1]
    %v701 = vunpack.i.l.s16 %v699
    %v702 = vunpack.i.h.s16 %v699
    %v703 = vpack.i.b16 %v701, %v701
    %v704 = vpack.i.b16 %v702, %v702
    %v706 = vunpack.c.l.s4 286326784
    %v707 = vunpack.c.0.s8 %v706
    %v708 = vlaneseq
    %v709 = vshrl.u32 %v708, 7
    %v710 = vsub.s32 %v707, %v709
    %v711 = vrot.slane %v703, %v710
    %v713 = vunpack.c.l.s4 286326784
    %v714 = vunpack.c.0.s8 %v713
    %v715 = vlaneseq
    %v716 = vshrl.u32 %v715, 7
    %v717 = vsub.s32 %v714, %v716
    %v718 = vrot.slane %v704, %v717
    %719 = vrot.lane.b32.xlu0 %v711, 72
    %v720 = vpop.permute.xlu0 %719
    %721 = vrot.lane.b32.xlu0 %v718, 72
    %v722 = vpop.permute.xlu0 %721
    %v725 = vld [vmem:[#allocation3 + $0x4] sm:$0x8]
    %v726 = vsel %vm458, %v720, %v725
    %727 = vst [vmem:[#allocation3 + $0x4] sm:$0x8] %v726
    %v728 = vld [vmem:[#allocation3 + $0x10] sm:$0x8]
    %v729 = vsel %vm458, %v722, %v728
    %730 = vst [vmem:[#allocation3 + $0x10] sm:$0x8] %v729
    %v731 = vld [vmem:[#allocation3] sm:$0xf]
    %v732 = vld [vmem:[#allocation3 + $0x4] sm:$0xf]
    %v733 = vld [vmem:[#allocation3 + $0xc] sm:$0xf]
    %v734 = vld [vmem:[#allocation3 + $0x10] sm:$0xf]
    %v735 = vld [vmem:[#allocation10] sm:$0xf]
    %v736 = vld [vmem:[#allocation10 + $0x4] sm:$0xf]
    %v737 = vld [vmem:[#allocation10 + $0x8] sm:$0xf]
    %v738 = vld [vmem:[#allocation3 + $0x8] sm:$0x1]
    %v739 = vld [vmem:[#allocation3 + $0x14] sm:$0x1]
    %vm740 = vsmask.f32 7440
    %vm741 = vmor %vm418, %vm740
    %v743 = vshrl.u32 %v731, 16
    %v745 = vrot.slane %v743, 4
    %v746 = vshll.u32 %v731, 16
    %v748 = vrot.slane %v746, 5
    %v749 = vor.u32 %v745, %v748
    %v750 = vrot.slane %v749, 4
    %v752 = vshll.u32 %v732, 16
    %v754 = vrot.slane %v752, 5
    %v755 = vsel %vm741, %v750, %v754
    %v756 = vshrl.u32 %v732, 16
    %v758 = vrot.slane %v756, 4
    %v759 = vor.u32 %v758, %v754
    %v760 = vrot.slane %v759, 4
    %v762 = vshll.u32 %v738, 16
    %v764 = vrot.slane %v762, 5
    %v765 = vsel %vm741, %v760, %v764
    %v767 = vshrl.u32 %v733, 16
    %v769 = vrot.slane %v767, 4
    %v770 = vshll.u32 %v733, 16
    %v772 = vrot.slane %v770, 5
    %v773 = vor.u32 %v769, %v772
    %v774 = vrot.slane %v773, 4
    %v776 = vshll.u32 %v734, 16
    %v778 = vrot.slane %v776, 5
    %v779 = vsel %vm741, %v774, %v778
    %v780 = vshrl.u32 %v734, 16
    %v782 = vrot.slane %v780, 4
    %v783 = vor.u32 %v782, %v778
    %v784 = vrot.slane %v783, 4
    %v786 = vshll.u32 %v739, 16
    %v788 = vrot.slane %v786, 5
    %v789 = vsel %vm741, %v784, %v788
    %s790 = scalar_lea.vmem [#allocation10], 12
    %v791 = vld [vmem:[%s790] sm:$0xf]
    %v792 = vld [vmem:[%s790 + $0x4] sm:$0xf]
    %v793 = vld [vmem:[%s790 + $0x8] sm:$0xf]
    %v794 = vunpack.c.l.b16 %v755
    %v795 = vunpack.c.l.b16 %v765
    %v796 = vunpack.c.l.b16 %v779
    %v797 = vunpack.c.l.b16 %v789
    %v798 = vpack.c.b16 %v795, %v794
    %v799 = vpack.c.b16 %v797, %v796
    %v803 = vunpack.c.l.b16 %v791
    %v804 = vunpack.c.l.b16 %v792
    %v805 = vunpack.c.l.b16 %v793
    %v806 = vpack.c.b16 %v804, %v803
    %v807 = vpack.c.b16 %v805, %v805
    %vm809 = vcmask 195584
    %v811 = vsel %vm809, %v798, 0
    %v814 = vsel %vm809, %v799, 0
    %vm816 = vcmask 1043456
    %v818 = vsel %vm816, %v807, 0
    %820 = vmatprep.subr.bf16.mxu0 0
    %821 = vmatpush1.bf16.msra.mxu0 0
    %822 = vmatprep.subr.bf16.mxu0 0
    %823 = vmatpush1.bf16.msra.mxu0 0
    %824 = vmatprep.subr.bf16.mxu0 0
    %825 = vmatpush1.bf16.msra.mxu0 0
    %826 = vmatprep.subr.bf16.mxu0 0
    %827 = vmatpush1.bf16.msra.mxu0 0
    %828 = vmatprep.subr.bf16.mxu0 0
    %829 = vmatpush1.bf16.msra.mxu0 0
    %830 = vmatprep.subr.bf16.mxu0 0
    %831 = vmatpush1.bf16.msra.mxu0 0
    %832 = vmatprep.subr.bf16.mxu0 0
    %833 = vmatpush1.bf16.msra.mxu0 %v818
    %834 = vmatprep.subr.bf16.mxu0 0
    %835 = vmatpush1.bf16.msra.mxu0 %v806
    %836 = vmatprep.subr.bf16.mxu0 0
    %837 = vmatpush2.bf16.msra.mxu0 0
    %838 = vmatprep.subr.bf16.mxu0 0
    %839 = vmatpush2.bf16.msra.mxu0 0
    %840 = vmatprep.subr.bf16.mxu0 0
    %841 = vmatpush2.bf16.msra.mxu0 0
    %842 = vmatprep.subr.bf16.mxu0 0
    %843 = vmatpush2.bf16.msra.mxu0 0
    %844 = vmatprep.subr.bf16.mxu0 0
    %845 = vmatpush2.bf16.msra.mxu0 0
    %846 = vmatprep.subr.bf16.mxu0 0
    %847 = vmatpush2.bf16.msra.mxu0 0
    %848 = vmatprep.subr.bf16.mxu0 0
    %849 = vmatpush2.bf16.msra.mxu0 0
    %850 = vmatprep.subr.bf16.mxu0 0
    %851 = vmatpush2.bf16.msra.mxu0 0
    %852 = vmatprep.mubr.bf16.mxu0 0
    %853 = vmatmul.mubr.bf16.gmra.mxu0 %v811
    %v854 = vpop.f32.mrf.mxu0
    %v855 = vadd.f32 0.0, %v854
    %v856 = vpop.f32.mrf.mxu0
    %v857 = vpop.f32.mrf.mxu0
    %v858 = vadd.f32 0.0, %v857
    %v859 = vpop.f32.mrf.mxu0
    %860 = vmatprep.mubr.bf16.mxu0 0
    %861 = vmatmul.mubr.bf16.gmra.mxu0 %v814
    %v862 = vpop.f32.mrf.mxu0
    %v863 = vadd.f32 0.0, %v862
    %v864 = vpop.f32.mrf.mxu0
    %v865 = vpop.f32.mrf.mxu0
    %v866 = vadd.f32 0.0, %v865
    %v867 = vpop.f32.mrf.mxu0
    %868 = vdwg.mxu0
    %v873 = vunpack.c.l.b16 %v731
    %v874 = vunpack.c.l.b16 %v732
    %v875 = vunpack.c.l.b16 %v733
    %v876 = vunpack.c.l.b16 %v734
    %v877 = vpack.c.b16 %v874, %v873
    %v878 = vpack.c.b16 %v876, %v875
    %v882 = vunpack.c.l.b16 %v735
    %v883 = vunpack.c.l.b16 %v736
    %v884 = vunpack.c.l.b16 %v737
    %v885 = vpack.c.b16 %v883, %v882
    %v886 = vpack.c.b16 %v884, %v884
    %v889 = vsel %vm809, %v877, 0
    %v892 = vsel %vm809, %v878, 0
    %v895 = vsel %vm816, %v886, 0
    %897 = vmatprep.subr.bf16.mxu0 0
    %898 = vmatpush1.bf16.msra.mxu0 0
    %899 = vmatprep.subr.bf16.mxu0 0
    %900 = vmatpush1.bf16.msra.mxu0 0
    %901 = vmatprep.subr.bf16.mxu0 0
    %902 = vmatpush1.bf16.msra.mxu0 0
    %903 = vmatprep.subr.bf16.mxu0 0
    %904 = vmatpush1.bf16.msra.mxu0 0
    %905 = vmatprep.subr.bf16.mxu0 0
    %906 = vmatpush1.bf16.msra.mxu0 0
    %907 = vmatprep.subr.bf16.mxu0 0
    %908 = vmatpush1.bf16.msra.mxu0 0
    %909 = vmatprep.subr.bf16.mxu0 0
    %910 = vmatpush1.bf16.msra.mxu0 %v895
    %911 = vmatprep.subr.bf16.mxu0 0
    %912 = vmatpush1.bf16.msra.mxu0 %v885
    %913 = vmatprep.subr.bf16.mxu0 0
    %914 = vmatpush2.bf16.msra.mxu0 0
    %915 = vmatprep.subr.bf16.mxu0 0
    %916 = vmatpush2.bf16.msra.mxu0 0
    %917 = vmatprep.subr.bf16.mxu0 0
    %918 = vmatpush2.bf16.msra.mxu0 0
    %919 = vmatprep.subr.bf16.mxu0 0
    %920 = vmatpush2.bf16.msra.mxu0 0
    %921 = vmatprep.subr.bf16.mxu0 0
    %922 = vmatpush2.bf16.msra.mxu0 0
    %923 = vmatprep.subr.bf16.mxu0 0
    %924 = vmatpush2.bf16.msra.mxu0 0
    %925 = vmatprep.subr.bf16.mxu0 0
    %926 = vmatpush2.bf16.msra.mxu0 0
    %927 = vmatprep.subr.bf16.mxu0 0
    %928 = vmatpush2.bf16.msra.mxu0 0
    %929 = vmatprep.mubr.bf16.mxu0 0
    %930 = vmatmul.mubr.bf16.gmra.mxu0 %v889
    %v931 = vpop.f32.mrf.mxu0
    %v932 = vadd.f32 %v855, %v931
    %v933 = vpop.f32.mrf.mxu0
    %v934 = vpop.f32.mrf.mxu0
    %v935 = vadd.f32 %v858, %v934
    %v936 = vpop.f32.mrf.mxu0
    %937 = vmatprep.mubr.bf16.mxu0 0
    %938 = vmatmul.mubr.bf16.gmra.mxu0 %v892
    %v939 = vpop.f32.mrf.mxu0
    %v940 = vadd.f32 %v863, %v939
    %v941 = vpop.f32.mrf.mxu0
    %v942 = vpop.f32.mrf.mxu0
    %v943 = vadd.f32 %v866, %v942
    %v944 = vpop.f32.mrf.mxu0
    %945 = vdwg.mxu0
    %v946 = vld [vmem:[#allocation3] sm:$0xe]
    %v947 = vld [vmem:[#allocation3 + $0xc] sm:$0xe]
    %vm952 = vcmask 1042432
    %vm953 = vcmask 1046532
    %vm954 = vmor %vm952, %vm953
    %v955 = vrot.slane %v946, 5
    %v956 = vrot.slane %v955, 4
    %v957 = vrot.slane %v732, 5
    %v958 = vsel %vm954, %v956, %v957
    %v959 = vrot.slane %v957, 4
    %v960 = vrot.slane %v738, 5
    %v961 = vsel %vm954, %v959, %v960
    %v962 = vrot.slane %v947, 5
    %v963 = vrot.slane %v962, 4
    %v964 = vrot.slane %v734, 5
    %v965 = vsel %vm954, %v963, %v964
    %v966 = vrot.slane %v964, 4
    %v967 = vrot.slane %v739, 5
    %v968 = vsel %vm954, %v966, %v967
    %s969 = scalar_lea.vmem [#allocation10], 24
    %v970 = vld [vmem:[%s969] sm:$0xf]
    %v971 = vld [vmem:[%s969 + $0x4] sm:$0xf]
    %v972 = vld [vmem:[%s969 + $0x8] sm:$0xf]
    %v973 = vunpack.c.l.b16 %v958
    %v974 = vunpack.c.l.b16 %v961
    %v975 = vunpack.c.l.b16 %v965
    %v976 = vunpack.c.l.b16 %v968
    %v977 = vpack.c.b16 %v974, %v973
    %v978 = vpack.c.b16 %v976, %v975
    %v982 = vunpack.c.l.b16 %v970
    %v983 = vunpack.c.l.b16 %v971
    %v984 = vunpack.c.l.b16 %v972
    %v985 = vpack.c.b16 %v983, %v982
    %v986 = vpack.c.b16 %v984, %v984
    %v989 = vsel %vm809, %v977, 0
    %v992 = vsel %vm809, %v978, 0
    %v995 = vsel %vm816, %v986, 0
    %997 = vmatprep.subr.bf16.mxu0 0
    %998 = vmatpush1.bf16.msra.mxu0 0
    %999 = vmatprep.subr.bf16.mxu0 0
    %1000 = vmatpush1.bf16.msra.mxu0 0
    %1001 = vmatprep.subr.bf16.mxu0 0
    %1002 = vmatpush1.bf16.msra.mxu0 0
    %1003 = vmatprep.subr.bf16.mxu0 0
    %1004 = vmatpush1.bf16.msra.mxu0 0
    %1005 = vmatprep.subr.bf16.mxu0 0
    %1006 = vmatpush1.bf16.msra.mxu0 0
    %1007 = vmatprep.subr.bf16.mxu0 0
    %1008 = vmatpush1.bf16.msra.mxu0 0
    %1009 = vmatprep.subr.bf16.mxu0 0
    %1010 = vmatpush1.bf16.msra.mxu0 %v995
    %1011 = vmatprep.subr.bf16.mxu0 0
    %1012 = vmatpush1.bf16.msra.mxu0 %v985
    %1013 = vmatprep.subr.bf16.mxu0 0
    %1014 = vmatpush2.bf16.msra.mxu0 0
    %1015 = vmatprep.subr.bf16.mxu0 0
    %1016 = vmatpush2.bf16.msra.mxu0 0
    %1017 = vmatprep.subr.bf16.mxu0 0
    %1018 = vmatpush2.bf16.msra.mxu0 0
    %1019 = vmatprep.subr.bf16.mxu0 0
    %1020 = vmatpush2.bf16.msra.mxu0 0
    %1021 = vmatprep.subr.bf16.mxu0 0
    %1022 = vmatpush2.bf16.msra.mxu0 0
    %1023 = vmatprep.subr.bf16.mxu0 0
    %1024 = vmatpush2.bf16.msra.mxu0 0
    %1025 = vmatprep.subr.bf16.mxu0 0
    %1026 = vmatpush2.bf16.msra.mxu0 0
    %1027 = vmatprep.subr.bf16.mxu0 0
    %1028 = vmatpush2.bf16.msra.mxu0 0
    %1029 = vmatprep.mubr.bf16.mxu0 0
    %1030 = vmatmul.mubr.bf16.gmra.mxu0 %v989
    %v1031 = vpop.f32.mrf.mxu0
    %v1032 = vadd.f32 0.0, %v1031
    %v1033 = vpop.f32.mrf.mxu0
    %v1034 = vpop.f32.mrf.mxu0
    %v1035 = vadd.f32 0.0, %v1034
    %v1036 = vpop.f32.mrf.mxu0
    %1037 = vmatprep.mubr.bf16.mxu0 0
    %1038 = vmatmul.mubr.bf16.gmra.mxu0 %v992
    %v1039 = vpop.f32.mrf.mxu0
    %v1040 = vadd.f32 0.0, %v1039
    %v1041 = vpop.f32.mrf.mxu0
    %v1042 = vpop.f32.mrf.mxu0
    %v1043 = vadd.f32 0.0, %v1042
    %v1044 = vpop.f32.mrf.mxu0
    %1045 = vdwg.mxu0
    %v1046 = vadd.f32 %v932, %v1032
    %v1047 = vadd.f32 %v935, %v1035
    %v1048 = vadd.f32 %v940, %v1040
    %v1049 = vadd.f32 %v943, %v1043
    %v1050 = vld [vmem:[%s4] sm:$0x1]
    %v1052 = vlaneseq
    %v1053 = vshrl.u32 %v1052, 7
    %v1054 = vsub.s32 0, %v1053
    %v1055 = vrot.slane %v1050, %v1054
    %v1057 = vadd.f32 %v1046, %v1055
    %v1058 = vadd.f32 %v1047, %v1055
    %v1059 = vadd.f32 %v1048, %v1055
    %v1060 = vadd.f32 %v1049, %v1055
    %v1061 = vmax.f32 %v1057, 0.0
    %v1062 = vmax.f32 %v1058, 0.0
    %v1063 = vmax.f32 %v1059, 0.0
    %v1064 = vmax.f32 %v1060, 0.0
    %vm1065 = vcmask 125952
    %1066 = vst.msk [vmem:[#allocation4] sm:$0xf] %vm1065, 0
    %1067 = vst.msk [vmem:[#allocation4 + $0x4] sm:$0xf] %vm1065, 0
    %vm1068 = vcmask 122880
    %1069 = vst.msk [vmem:[#allocation4 + $0x8] sm:$0x1] %vm1068, 0
    %1070 = vst.msk [vmem:[#allocation4 + $0xc] sm:$0xf] %vm1065, 0
    %1071 = vst.msk [vmem:[#allocation4 + $0x10] sm:$0xf] %vm1065, 0
    %1072 = vst.msk [vmem:[#allocation4 + $0x14] sm:$0x1] %vm1068, 0
    %v1073 = vpack.c.bf16 %v1062, %v1061
    %v1074 = vpack.c.bf16 %v1064, %v1063
    %v1077 = vunpack.c.l.b16 %v1073
    %v1078 = vunpack.c.h.b16 %v1073
    %v1079 = vunpack.c.l.b16 %v1074
    %v1080 = vunpack.c.h.b16 %v1074
    %v1081 = vpack.c.b16 %v1077, %v1077
    %v1082 = vpack.c.b16 %v1078, %v1078
    %v1083 = vpack.c.b16 %v1079, %v1079
    %v1084 = vpack.c.b16 %v1080, %v1080
    %vm1085 = vcmask 1040384
    %vm1086 = vcmask 1044484
    %vm1087 = vmor %vm1085, %vm1086
    %v1088 = vrot.slane %v1081, 7
    %v1089 = vrot.slane %v1088, 4
    %v1090 = vrot.slane %v1082, 7
    %v1091 = vsel %vm1087, %v1089, %v1090
    %v1092 = vrot.slane %v1090, 4
    %v1093 = vrot.slane %v1083, 7
    %v1094 = vrot.slane %v1093, 4
    %v1095 = vrot.slane %v1084, 7
    %v1096 = vsel %vm1087, %v1094, %v1095
    %v1097 = vrot.slane %v1095, 4
    %vm1104 = vcmask 125953
    %1105 = vst.msk [vmem:[#allocation4] sm:$0xe] %vm1104, %v1088
    %1106 = vst.msk [vmem:[#allocation4 + $0x4] sm:$0xf] %vm1065, %v1091
    %1107 = vst.msk [vmem:[#allocation4 + $0x8] sm:$0x1] %vm1068, %v1092
    %1108 = vst.msk [vmem:[#allocation4 + $0xc] sm:$0xe] %vm1104, %v1093
    %1109 = vst.msk [vmem:[#allocation4 + $0x10] sm:$0xf] %vm1065, %v1096
    %1110 = vst.msk [vmem:[#allocation4 + $0x14] sm:$0x1] %vm1068, %v1097
    %v1111 = vld [vmem:[#allocation4] sm:$0xf]
    %v1112 = vld [vmem:[#allocation4 + $0x4] sm:$0xf]
    %v1113 = vld [vmem:[#allocation4 + $0xc] sm:$0xf]
    %v1114 = vld [vmem:[#allocation4 + $0x10] sm:$0xf]
    %v1115 = vld [vmem:[#allocation11] sm:$0xf]
    %v1116 = vld [vmem:[#allocation11 + $0x4] sm:$0xf]
    %v1117 = vld [vmem:[#allocation4 + $0x8] sm:$0x1]
    %v1118 = vld [vmem:[#allocation4 + $0x14] sm:$0x1]
    %v1120 = vshrl.u32 %v1111, 16
    %v1122 = vrot.slane %v1120, 4
    %v1123 = vshll.u32 %v1111, 16
    %v1125 = vrot.slane %v1123, 5
    %v1126 = vor.u32 %v1122, %v1125
    %v1127 = vrot.slane %v1126, 4
    %v1129 = vshll.u32 %v1112, 16
    %v1131 = vrot.slane %v1129, 5
    %v1132 = vsel %vm741, %v1127, %v1131
    %v1133 = vshrl.u32 %v1112, 16
    %v1135 = vrot.slane %v1133, 4
    %v1136 = vor.u32 %v1135, %v1131
    %v1137 = vrot.slane %v1136, 4
    %v1139 = vshll.u32 %v1117, 16
    %v1141 = vrot.slane %v1139, 5
    %v1142 = vsel %vm741, %v1137, %v1141
    %v1144 = vshrl.u32 %v1113, 16
    %v1146 = vrot.slane %v1144, 4
    %v1147 = vshll.u32 %v1113, 16
    %v1149 = vrot.slane %v1147, 5
    %v1150 = vor.u32 %v1146, %v1149
    %v1151 = vrot.slane %v1150, 4
    %v1153 = vshll.u32 %v1114, 16
    %v1155 = vrot.slane %v1153, 5
    %v1156 = vsel %vm741, %v1151, %v1155
    %v1157 = vshrl.u32 %v1114, 16
    %v1159 = vrot.slane %v1157, 4
    %v1160 = vor.u32 %v1159, %v1155
    %v1161 = vrot.slane %v1160, 4
    %v1163 = vshll.u32 %v1118, 16
    %v1165 = vrot.slane %v1163, 5
    %v1166 = vsel %vm741, %v1161, %v1165
    %s1167 = scalar_lea.vmem [#allocation11], 8
    %v1168 = vld [vmem:[%s1167] sm:$0xf]
    %v1169 = vld [vmem:[%s1167 + $0x4] sm:$0xf]
    %v1170 = vunpack.c.l.b16 %v1132
    %v1171 = vunpack.c.l.b16 %v1142
    %v1172 = vunpack.c.l.b16 %v1156
    %v1173 = vunpack.c.l.b16 %v1166
    %v1174 = vpack.c.b16 %v1171, %v1170
    %v1175 = vpack.c.b16 %v1173, %v1172
    %v1178 = vunpack.c.l.b16 %v1168
    %v1179 = vunpack.c.l.b16 %v1169
    %v1180 = vpack.c.b16 %v1179, %v1178
    %v1183 = vsel %vm125, %v1174, 0
    %v1186 = vsel %vm125, %v1175, 0
    %1188 = vmatprep.subr.bf16.mxu0 0
    %1189 = vmatpush1.bf16.msra.mxu0 0
    %1190 = vmatprep.subr.bf16.mxu0 0
    %1191 = vmatpush1.bf16.msra.mxu0 0
    %1192 = vmatprep.subr.bf16.mxu0 0
    %1193 = vmatpush1.bf16.msra.mxu0 0
    %1194 = vmatprep.subr.bf16.mxu0 0
    %1195 = vmatpush1.bf16.msra.mxu0 0
    %1196 = vmatprep.subr.bf16.mxu0 0
    %1197 = vmatpush1.bf16.msra.mxu0 0
    %1198 = vmatprep.subr.bf16.mxu0 0
    %1199 = vmatpush1.bf16.msra.mxu0 0
    %1200 = vmatprep.subr.bf16.mxu0 0
    %1201 = vmatpush1.bf16.msra.mxu0 0
    %1202 = vmatprep.subr.bf16.mxu0 0
    %1203 = vmatpush1.bf16.msra.mxu0 %v1180
    %1204 = vmatprep.subr.bf16.mxu0 0
    %1205 = vmatpush2.bf16.msra.mxu0 0
    %1206 = vmatprep.subr.bf16.mxu0 0
    %1207 = vmatpush2.bf16.msra.mxu0 0
    %1208 = vmatprep.subr.bf16.mxu0 0
    %1209 = vmatpush2.bf16.msra.mxu0 0
    %1210 = vmatprep.subr.bf16.mxu0 0
    %1211 = vmatpush2.bf16.msra.mxu0 0
    %1212 = vmatprep.subr.bf16.mxu0 0
    %1213 = vmatpush2.bf16.msra.mxu0 0
    %1214 = vmatprep.subr.bf16.mxu0 0
    %1215 = vmatpush2.bf16.msra.mxu0 0
    %1216 = vmatprep.subr.bf16.mxu0 0
    %1217 = vmatpush2.bf16.msra.mxu0 0
    %1218 = vmatprep.subr.bf16.mxu0 0
    %1219 = vmatpush2.bf16.msra.mxu0 0
    %1220 = vmatprep.mubr.bf16.mxu0 0
    %1221 = vmatmul.mubr.bf16.gmra.mxu0 %v1183
    %v1222 = vpop.f32.mrf.mxu0
    %v1223 = vadd.f32 0.0, %v1222
    %v1224 = vpop.f32.mrf.mxu0
    %v1225 = vpop.f32.mrf.mxu0
    %v1226 = vadd.f32 0.0, %v1225
    %v1227 = vpop.f32.mrf.mxu0
    %1228 = vmatprep.mubr.bf16.mxu0 0
    %1229 = vmatmul.mubr.bf16.gmra.mxu0 %v1186
    %v1230 = vpop.f32.mrf.mxu0
    %v1231 = vadd.f32 0.0, %v1230
    %v1232 = vpop.f32.mrf.mxu0
    %v1233 = vpop.f32.mrf.mxu0
    %v1234 = vadd.f32 0.0, %v1233
    %v1235 = vpop.f32.mrf.mxu0
    %1236 = vdwg.mxu0
    %v1241 = vunpack.c.l.b16 %v1111
    %v1242 = vunpack.c.l.b16 %v1112
    %v1243 = vunpack.c.l.b16 %v1113
    %v1244 = vunpack.c.l.b16 %v1114
    %v1245 = vpack.c.b16 %v1242, %v1241
    %v1246 = vpack.c.b16 %v1244, %v1243
    %v1249 = vunpack.c.l.b16 %v1115
    %v1250 = vunpack.c.l.b16 %v1116
    %v1251 = vpack.c.b16 %v1250, %v1249
    %v1254 = vsel %vm125, %v1245, 0
    %v1257 = vsel %vm125, %v1246, 0
    %1259 = vmatprep.subr.bf16.mxu0 0
    %1260 = vmatpush1.bf16.msra.mxu0 0
    %1261 = vmatprep.subr.bf16.mxu0 0
    %1262 = vmatpush1.bf16.msra.mxu0 0
    %1263 = vmatprep.subr.bf16.mxu0 0
    %1264 = vmatpush1.bf16.msra.mxu0 0
    %1265 = vmatprep.subr.bf16.mxu0 0
    %1266 = vmatpush1.bf16.msra.mxu0 0
    %1267 = vmatprep.subr.bf16.mxu0 0
    %1268 = vmatpush1.bf16.msra.mxu0 0
    %1269 = vmatprep.subr.bf16.mxu0 0
    %1270 = vmatpush1.bf16.msra.mxu0 0
    %1271 = vmatprep.subr.bf16.mxu0 0
    %1272 = vmatpush1.bf16.msra.mxu0 0
    %1273 = vmatprep.subr.bf16.mxu0 0
    %1274 = vmatpush1.bf16.msra.mxu0 %v1251
    %1275 = vmatprep.subr.bf16.mxu0 0
    %1276 = vmatpush2.bf16.msra.mxu0 0
    %1277 = vmatprep.subr.bf16.mxu0 0
    %1278 = vmatpush2.bf16.msra.mxu0 0
    %1279 = vmatprep.subr.bf16.mxu0 0
    %1280 = vmatpush2.bf16.msra.mxu0 0
    %1281 = vmatprep.subr.bf16.mxu0 0
    %1282 = vmatpush2.bf16.msra.mxu0 0
    %1283 = vmatprep.subr.bf16.mxu0 0
    %1284 = vmatpush2.bf16.msra.mxu0 0
    %1285 = vmatprep.subr.bf16.mxu0 0
    %1286 = vmatpush2.bf16.msra.mxu0 0
    %1287 = vmatprep.subr.bf16.mxu0 0
    %1288 = vmatpush2.bf16.msra.mxu0 0
    %1289 = vmatprep.subr.bf16.mxu0 0
    %1290 = vmatpush2.bf16.msra.mxu0 0
    %1291 = vmatprep.mubr.bf16.mxu0 0
    %1292 = vmatmul.mubr.bf16.gmra.mxu0 %v1254
    %v1293 = vpop.f32.mrf.mxu0
    %v1294 = vadd.f32 %v1223, %v1293
    %v1295 = vpop.f32.mrf.mxu0
    %v1296 = vpop.f32.mrf.mxu0
    %v1297 = vadd.f32 %v1226, %v1296
    %v1298 = vpop.f32.mrf.mxu0
    %1299 = vmatprep.mubr.bf16.mxu0 0
    %1300 = vmatmul.mubr.bf16.gmra.mxu0 %v1257
    %v1301 = vpop.f32.mrf.mxu0
    %v1302 = vadd.f32 %v1231, %v1301
    %v1303 = vpop.f32.mrf.mxu0
    %v1304 = vpop.f32.mrf.mxu0
    %v1305 = vadd.f32 %v1234, %v1304
    %v1306 = vpop.f32.mrf.mxu0
    %1307 = vdwg.mxu0
    %v1308 = vld [vmem:[#allocation4] sm:$0xe]
    %v1309 = vld [vmem:[#allocation4 + $0xc] sm:$0xe]
    %v1314 = vrot.slane %v1308, 5
    %v1315 = vrot.slane %v1314, 4
    %v1316 = vrot.slane %v1112, 5
    %v1317 = vsel %vm954, %v1315, %v1316
    %v1318 = vrot.slane %v1316, 4
    %v1319 = vrot.slane %v1117, 5
    %v1320 = vsel %vm954, %v1318, %v1319
    %v1321 = vrot.slane %v1309, 5
    %v1322 = vrot.slane %v1321, 4
    %v1323 = vrot.slane %v1114, 5
    %v1324 = vsel %vm954, %v1322, %v1323
    %v1325 = vrot.slane %v1323, 4
    %v1326 = vrot.slane %v1118, 5
    %v1327 = vsel %vm954, %v1325, %v1326
    %s1328 = scalar_lea.vmem [#allocation11], 16
    %v1329 = vld [vmem:[%s1328] sm:$0xf]
    %v1330 = vld [vmem:[%s1328 + $0x4] sm:$0xf]
    %v1331 = vunpack.c.l.b16 %v1317
    %v1332 = vunpack.c.l.b16 %v1320
    %v1333 = vunpack.c.l.b16 %v1324
    %v1334 = vunpack.c.l.b16 %v1327
    %v1335 = vpack.c.b16 %v1332, %v1331
    %v1336 = vpack.c.b16 %v1334, %v1333
    %v1339 = vunpack.c.l.b16 %v1329
    %v1340 = vunpack.c.l.b16 %v1330
    %v1341 = vpack.c.b16 %v1340, %v1339
    %v1344 = vsel %vm125, %v1335, 0
    %v1347 = vsel %vm125, %v1336, 0
    %1349 = vmatprep.subr.bf16.mxu0 0
    %1350 = vmatpush1.bf16.msra.mxu0 0
    %1351 = vmatprep.subr.bf16.mxu0 0
    %1352 = vmatpush1.bf16.msra.mxu0 0
    %1353 = vmatprep.subr.bf16.mxu0 0
    %1354 = vmatpush1.bf16.msra.mxu0 0
    %1355 = vmatprep.subr.bf16.mxu0 0
    %1356 = vmatpush1.bf16.msra.mxu0 0
    %1357 = vmatprep.subr.bf16.mxu0 0
    %1358 = vmatpush1.bf16.msra.mxu0 0
    %1359 = vmatprep.subr.bf16.mxu0 0
    %1360 = vmatpush1.bf16.msra.mxu0 0
    %1361 = vmatprep.subr.bf16.mxu0 0
    %1362 = vmatpush1.bf16.msra.mxu0 0
    %1363 = vmatprep.subr.bf16.mxu0 0
    %1364 = vmatpush1.bf16.msra.mxu0 %v1341
    %1365 = vmatprep.subr.bf16.mxu0 0
    %1366 = vmatpush2.bf16.msra.mxu0 0
    %1367 = vmatprep.subr.bf16.mxu0 0
    %1368 = vmatpush2.bf16.msra.mxu0 0
    %1369 = vmatprep.subr.bf16.mxu0 0
    %1370 = vmatpush2.bf16.msra.mxu0 0
    %1371 = vmatprep.subr.bf16.mxu0 0
    %1372 = vmatpush2.bf16.msra.mxu0 0
    %1373 = vmatprep.subr.bf16.mxu0 0
    %1374 = vmatpush2.bf16.msra.mxu0 0
    %1375 = vmatprep.subr.bf16.mxu0 0
    %1376 = vmatpush2.bf16.msra.mxu0 0
    %1377 = vmatprep.subr.bf16.mxu0 0
    %1378 = vmatpush2.bf16.msra.mxu0 0
    %1379 = vmatprep.subr.bf16.mxu0 0
    %1380 = vmatpush2.bf16.msra.mxu0 0
    %1381 = vmatprep.mubr.bf16.mxu0 0
    %1382 = vmatmul.mubr.bf16.gmra.mxu0 %v1344
    %v1383 = vpop.f32.mrf.mxu0
    %v1384 = vadd.f32 0.0, %v1383
    %v1385 = vpop.f32.mrf.mxu0
    %v1386 = vpop.f32.mrf.mxu0
    %v1387 = vadd.f32 0.0, %v1386
    %v1388 = vpop.f32.mrf.mxu0
    %1389 = vmatprep.mubr.bf16.mxu0 0
    %1390 = vmatmul.mubr.bf16.gmra.mxu0 %v1347
    %v1391 = vpop.f32.mrf.mxu0
    %v1392 = vadd.f32 0.0, %v1391
    %v1393 = vpop.f32.mrf.mxu0
    %v1394 = vpop.f32.mrf.mxu0
    %v1395 = vadd.f32 0.0, %v1394
    %v1396 = vpop.f32.mrf.mxu0
    %1397 = vdwg.mxu0
    %v1398 = vadd.f32 %v1294, %v1384
    %v1399 = vadd.f32 %v1297, %v1387
    %v1400 = vadd.f32 %v1302, %v1392
    %v1401 = vadd.f32 %v1305, %v1395
    %v1402 = vld [vmem:[%s6] sm:$0x1]
    %v1404 = vlaneseq
    %v1405 = vshrl.u32 %v1404, 7
    %v1406 = vsub.s32 0, %v1405
    %v1407 = vrot.slane %v1402, %v1406
    %v1409 = vadd.f32 %v1398, %v1407
    %v1410 = vadd.f32 %v1399, %v1407
    %v1411 = vadd.f32 %v1400, %v1407
    %v1412 = vadd.f32 %v1401, %v1407
    %v1413 = vmax.f32 %v1409, 0.0
    %v1414 = vmax.f32 %v1410, 0.0
    %v1415 = vmax.f32 %v1411, 0.0
    %v1416 = vmax.f32 %v1412, 0.0
    %vm1417 = vcmask 60416
    %1418 = vst.msk [vmem:[#allocation5] sm:$0xf] %vm1417, 0
    %1419 = vst.msk [vmem:[#allocation5 + $0x4] sm:$0xf] %vm1417, 0
    %1420 = vst.msk [vmem:[#allocation5 + $0x8] sm:$0xf] %vm1417, 0
    %1421 = vst.msk [vmem:[#allocation5 + $0xc] sm:$0xf] %vm1417, 0
    %vm1422 = vcmask 57344
    %1423 = vst.msk [vmem:[#allocation5 + $0x10] sm:$0x1] %vm1422, 0
    %1424 = vst.msk [vmem:[#allocation5 + $0x14] sm:$0xf] %vm1417, 0
    %1425 = vst.msk [vmem:[#allocation5 + $0x18] sm:$0xf] %vm1417, 0
    %1426 = vst.msk [vmem:[#allocation5 + $0x1c] sm:$0xf] %vm1417, 0
    %1427 = vst.msk [vmem:[#allocation5 + $0x20] sm:$0xf] %vm1417, 0
    %1428 = vst.msk [vmem:[#allocation5 + $0x24] sm:$0x1] %vm1422, 0
    %v1429 = vpack.c.bf16 %v1414, %v1413
    %v1430 = vpack.c.bf16 %v1416, %v1415
    %v1433 = vunpack.c.l.b16 %v1429
    %v1434 = vunpack.c.h.b16 %v1429
    %v1435 = vunpack.c.l.b16 %v1430
    %v1436 = vunpack.c.h.b16 %v1430
    %v1437 = vpack.c.b16 %v1433, %v1433
    %v1438 = vpack.c.b16 %v1434, %v1434
    %v1439 = vpack.c.b16 %v1435, %v1435
    %v1440 = vpack.c.b16 %v1436, %v1436
    %v1441 = vrot.slane %v1437, 7
    %v1442 = vrot.slane %v1441, 4
    %v1443 = vrot.slane %v1438, 7
    %v1444 = vsel %vm1087, %v1442, %v1443
    %v1445 = vrot.slane %v1443, 4
    %v1446 = vrot.slane %v1439, 7
    %v1447 = vrot.slane %v1446, 4
    %v1448 = vrot.slane %v1440, 7
    %v1449 = vsel %vm1087, %v1447, %v1448
    %v1450 = vrot.slane %v1448, 4
    %vm1457 = vcmask 60417
    %1458 = vst.msk [vmem:[#allocation5] sm:$0xe] %vm1457, %v1441
    %1459 = vst.msk [vmem:[#allocation5 + $0x4] sm:$0xf] %vm1417, %v1444
    %1460 = vst.msk [vmem:[#allocation5 + $0x8] sm:$0x1] %vm1422, %v1445
    %1461 = vst.msk [vmem:[#allocation5 + $0x14] sm:$0xe] %vm1457, %v1446
    %1462 = vst.msk [vmem:[#allocation5 + $0x18] sm:$0xf] %vm1417, %v1449
    %1463 = vst.msk [vmem:[#allocation5 + $0x1c] sm:$0x1] %vm1422, %v1450
    %v1464 = vld [vmem:[#allocation5] sm:$0xf]
    %v1465 = vld [vmem:[#allocation5 + $0x4] sm:$0xf]
    %v1466 = vld [vmem:[#allocation5 + $0x8] sm:$0xf]
    %v1467 = vld [vmem:[#allocation5 + $0xc] sm:$0xf]
    %v1468 = vld [vmem:[#allocation5 + $0x14] sm:$0xf]
    %v1469 = vld [vmem:[#allocation5 + $0x18] sm:$0xf]
    %v1470 = vld [vmem:[#allocation5 + $0x1c] sm:$0xf]
    %v1471 = vld [vmem:[#allocation5 + $0x20] sm:$0xf]
    %v1472 = vld [vmem:[%s7] sm:$0xf]
    %v1473 = vld [vmem:[#allocation5 + $0x10] sm:$0x1]
    %v1474 = vld [vmem:[#allocation5 + $0x24] sm:$0x1]
    %v1476 = vshrl.u32 %v1464, 16
    %v1478 = vrot.slane %v1476, 4
    %v1479 = vshll.u32 %v1464, 16
    %v1481 = vrot.slane %v1479, 5
    %v1482 = vor.u32 %v1478, %v1481
    %v1483 = vrot.slane %v1482, 4
    %v1485 = vshll.u32 %v1465, 16
    %v1487 = vrot.slane %v1485, 5
    %v1488 = vsel %vm741, %v1483, %v1487
    %v1489 = vshrl.u32 %v1465, 16
    %v1491 = vrot.slane %v1489, 4
    %v1492 = vor.u32 %v1491, %v1487
    %v1493 = vrot.slane %v1492, 4
    %v1495 = vshll.u32 %v1466, 16
    %v1497 = vrot.slane %v1495, 5
    %v1498 = vsel %vm741, %v1493, %v1497
    %v1499 = vshrl.u32 %v1466, 16
    %v1501 = vrot.slane %v1499, 4
    %v1502 = vor.u32 %v1501, %v1497
    %v1503 = vrot.slane %v1502, 4
    %v1505 = vshll.u32 %v1467, 16
    %v1507 = vrot.slane %v1505, 5
    %v1508 = vsel %vm741, %v1503, %v1507
    %v1509 = vshrl.u32 %v1467, 16
    %v1511 = vrot.slane %v1509, 4
    %v1512 = vor.u32 %v1511, %v1507
    %v1513 = vrot.slane %v1512, 4
    %v1515 = vshll.u32 %v1473, 16
    %v1517 = vrot.slane %v1515, 5
    %v1518 = vsel %vm741, %v1513, %v1517
    %v1520 = vshrl.u32 %v1468, 16
    %v1522 = vrot.slane %v1520, 4
    %v1523 = vshll.u32 %v1468, 16
    %v1525 = vrot.slane %v1523, 5
    %v1526 = vor.u32 %v1522, %v1525
    %v1527 = vrot.slane %v1526, 4
    %v1529 = vshll.u32 %v1469, 16
    %v1531 = vrot.slane %v1529, 5
    %v1532 = vsel %vm741, %v1527, %v1531
    %v1533 = vshrl.u32 %v1469, 16
    %v1535 = vrot.slane %v1533, 4
    %v1536 = vor.u32 %v1535, %v1531
    %v1537 = vrot.slane %v1536, 4
    %v1539 = vshll.u32 %v1470, 16
    %v1541 = vrot.slane %v1539, 5
    %v1542 = vsel %vm741, %v1537, %v1541
    %v1543 = vshrl.u32 %v1470, 16
    %v1545 = vrot.slane %v1543, 4
    %v1546 = vor.u32 %v1545, %v1541
    %v1547 = vrot.slane %v1546, 4
    %v1549 = vshll.u32 %v1471, 16
    %v1551 = vrot.slane %v1549, 5
    %v1552 = vsel %vm741, %v1547, %v1551
    %v1553 = vshrl.u32 %v1471, 16
    %v1555 = vrot.slane %v1553, 4
    %v1556 = vor.u32 %v1555, %v1551
    %v1557 = vrot.slane %v1556, 4
    %v1559 = vshll.u32 %v1474, 16
    %v1561 = vrot.slane %v1559, 5
    %v1562 = vsel %vm741, %v1557, %v1561
    %s1563 = scalar_lea.vmem %s7, 4
    %v1564 = vld [vmem:[%s1563] sm:$0xf]
    %v1565 = vunpack.c.l.b16 %v1488
    %v1566 = vunpack.c.l.b16 %v1498
    %v1567 = vunpack.c.l.b16 %v1508
    %v1568 = vunpack.c.l.b16 %v1518
    %v1569 = vunpack.c.l.b16 %v1532
    %v1570 = vunpack.c.l.b16 %v1542
    %v1571 = vunpack.c.l.b16 %v1552
    %v1572 = vunpack.c.l.b16 %v1562
    %v1573 = vpack.c.b16 %v1566, %v1565
    %v1574 = vpack.c.b16 %v1568, %v1567
    %v1575 = vpack.c.b16 %v1570, %v1569
    %v1576 = vpack.c.b16 %v1572, %v1571
    %vm1577 = vcmask 64512
    %v1579 = vsel %vm1577, %v1573, 0
    %v1582 = vsel %vm1577, %v1574, 0
    %v1585 = vsel %vm1577, %v1575, 0
    %v1588 = vsel %vm1577, %v1576, 0
    %v1591 = vsel %vm816, %v1564, 0
    %1593 = vmatprep.subr.bf16.mxu0 0
    %1594 = vmatpush1.bf16.msra.mxu0 0
    %1595 = vmatprep.subr.bf16.mxu0 0
    %1596 = vmatpush1.bf16.msra.mxu0 0
    %1597 = vmatprep.subr.bf16.mxu0 0
    %1598 = vmatpush1.bf16.msra.mxu0 0
    %1599 = vmatprep.subr.bf16.mxu0 0
    %1600 = vmatpush1.bf16.msra.mxu0 0
    %1601 = vmatprep.subr.bf16.mxu0 0
    %1602 = vmatpush1.bf16.msra.mxu0 0
    %1603 = vmatprep.subr.bf16.mxu0 0
    %1604 = vmatpush1.bf16.msra.mxu0 0
    %1605 = vmatprep.subr.bf16.mxu0 0
    %1606 = vmatpush1.bf16.msra.mxu0 0
    %1607 = vmatprep.subr.bf16.mxu0 0
    %1608 = vmatpush1.bf16.msra.mxu0 %v1591
    %1609 = vmatprep.subr.bf16.mxu0 0
    %1610 = vmatpush2.bf16.msra.mxu0 0
    %1611 = vmatprep.subr.bf16.mxu0 0
    %1612 = vmatpush2.bf16.msra.mxu0 0
    %1613 = vmatprep.subr.bf16.mxu0 0
    %1614 = vmatpush2.bf16.msra.mxu0 0
    %1615 = vmatprep.subr.bf16.mxu0 0
    %1616 = vmatpush2.bf16.msra.mxu0 0
    %1617 = vmatprep.subr.bf16.mxu0 0
    %1618 = vmatpush2.bf16.msra.mxu0 0
    %1619 = vmatprep.subr.bf16.mxu0 0
    %1620 = vmatpush2.bf16.msra.mxu0 0
    %1621 = vmatprep.subr.bf16.mxu0 0
    %1622 = vmatpush2.bf16.msra.mxu0 0
    %1623 = vmatprep.subr.bf16.mxu0 0
    %1624 = vmatpush2.bf16.msra.mxu0 0
    %1625 = vmatprep.mubr.bf16.mxu0 0
    %1626 = vmatmul.mubr.bf16.gmra.mxu0 %v1579
    %v1627 = vpop.f32.mrf.mxu0
    %v1628 = vadd.f32 0.0, %v1627
    %v1629 = vpop.f32.mrf.mxu0
    %v1630 = vpop.f32.mrf.mxu0
    %v1631 = vadd.f32 0.0, %v1630
    %v1632 = vpop.f32.mrf.mxu0
    %1633 = vmatprep.mubr.bf16.mxu0 0
    %1634 = vmatmul.mubr.bf16.gmra.mxu0 %v1582
    %v1635 = vpop.f32.mrf.mxu0
    %v1636 = vadd.f32 0.0, %v1635
    %v1637 = vpop.f32.mrf.mxu0
    %v1638 = vpop.f32.mrf.mxu0
    %v1639 = vpop.f32.mrf.mxu0
    %1640 = vmatprep.mubr.bf16.mxu0 0
    %1641 = vmatmul.mubr.bf16.gmra.mxu0 %v1585
    %v1642 = vpop.f32.mrf.mxu0
    %v1643 = vadd.f32 0.0, %v1642
    %v1644 = vpop.f32.mrf.mxu0
    %v1645 = vpop.f32.mrf.mxu0
    %v1646 = vadd.f32 0.0, %v1645
    %v1647 = vpop.f32.mrf.mxu0
    %1648 = vmatprep.mubr.bf16.mxu0 0
    %1649 = vmatmul.mubr.bf16.gmra.mxu0 %v1588
    %v1650 = vpop.f32.mrf.mxu0
    %v1651 = vadd.f32 0.0, %v1650
    %v1652 = vpop.f32.mrf.mxu0
    %v1653 = vpop.f32.mrf.mxu0
    %v1654 = vpop.f32.mrf.mxu0
    %1655 = vdwg.mxu0
    %v1664 = vunpack.c.l.b16 %v1464
    %v1665 = vunpack.c.l.b16 %v1465
    %v1666 = vunpack.c.l.b16 %v1466
    %v1667 = vunpack.c.l.b16 %v1467
    %v1668 = vunpack.c.l.b16 %v1468
    %v1669 = vunpack.c.l.b16 %v1469
    %v1670 = vunpack.c.l.b16 %v1470
    %v1671 = vunpack.c.l.b16 %v1471
    %v1672 = vpack.c.b16 %v1665, %v1664
    %v1673 = vpack.c.b16 %v1667, %v1666
    %v1674 = vpack.c.b16 %v1669, %v1668
    %v1675 = vpack.c.b16 %v1671, %v1670
    %v1677 = vsel %vm1577, %v1672, 0
    %v1680 = vsel %vm1577, %v1673, 0
    %v1683 = vsel %vm1577, %v1674, 0
    %v1686 = vsel %vm1577, %v1675, 0
    %v1689 = vsel %vm816, %v1472, 0
    %1691 = vmatprep.subr.bf16.mxu0 0
    %1692 = vmatpush1.bf16.msra.mxu0 0
    %1693 = vmatprep.subr.bf16.mxu0 0
    %1694 = vmatpush1.bf16.msra.mxu0 0
    %1695 = vmatprep.subr.bf16.mxu0 0
    %1696 = vmatpush1.bf16.msra.mxu0 0
    %1697 = vmatprep.subr.bf16.mxu0 0
    %1698 = vmatpush1.bf16.msra.mxu0 0
    %1699 = vmatprep.subr.bf16.mxu0 0
    %1700 = vmatpush1.bf16.msra.mxu0 0
    %1701 = vmatprep.subr.bf16.mxu0 0
    %1702 = vmatpush1.bf16.msra.mxu0 0
    %1703 = vmatprep.subr.bf16.mxu0 0
    %1704 = vmatpush1.bf16.msra.mxu0 0
    %1705 = vmatprep.subr.bf16.mxu0 0
    %1706 = vmatpush1.bf16.msra.mxu0 %v1689
    %1707 = vmatprep.subr.bf16.mxu0 0
    %1708 = vmatpush2.bf16.msra.mxu0 0
    %1709 = vmatprep.subr.bf16.mxu0 0
    %1710 = vmatpush2.bf16.msra.mxu0 0
    %1711 = vmatprep.subr.bf16.mxu0 0
    %1712 = vmatpush2.bf16.msra.mxu0 0
    %1713 = vmatprep.subr.bf16.mxu0 0
    %1714 = vmatpush2.bf16.msra.mxu0 0
    %1715 = vmatprep.subr.bf16.mxu0 0
    %1716 = vmatpush2.bf16.msra.mxu0 0
    %1717 = vmatprep.subr.bf16.mxu0 0
    %1718 = vmatpush2.bf16.msra.mxu0 0
    %1719 = vmatprep.subr.bf16.mxu0 0
    %1720 = vmatpush2.bf16.msra.mxu0 0
    %1721 = vmatprep.subr.bf16.mxu0 0
    %1722 = vmatpush2.bf16.msra.mxu0 0
    %1723 = vmatprep.mubr.bf16.mxu0 0
    %1724 = vmatmul.mubr.bf16.gmra.mxu0 %v1677
    %v1725 = vpop.f32.mrf.mxu0
    %v1726 = vadd.f32 %v1628, %v1725
    %v1727 = vpop.f32.mrf.mxu0
    %v1728 = vpop.f32.mrf.mxu0
    %v1729 = vadd.f32 %v1631, %v1728
    %v1730 = vpop.f32.mrf.mxu0
    %1731 = vmatprep.mubr.bf16.mxu0 0
    %1732 = vmatmul.mubr.bf16.gmra.mxu0 %v1680
    %v1733 = vpop.f32.mrf.mxu0
    %v1734 = vadd.f32 %v1636, %v1733
    %v1735 = vpop.f32.mrf.mxu0
    %v1736 = vpop.f32.mrf.mxu0
    %v1737 = vpop.f32.mrf.mxu0
    %1738 = vmatprep.mubr.bf16.mxu0 0
    %1739 = vmatmul.mubr.bf16.gmra.mxu0 %v1683
    %v1740 = vpop.f32.mrf.mxu0
    %v1741 = vadd.f32 %v1643, %v1740
    %v1742 = vpop.f32.mrf.mxu0
    %v1743 = vpop.f32.mrf.mxu0
    %v1744 = vadd.f32 %v1646, %v1743
    %v1745 = vpop.f32.mrf.mxu0
    %1746 = vmatprep.mubr.bf16.mxu0 0
    %1747 = vmatmul.mubr.bf16.gmra.mxu0 %v1686
    %v1748 = vpop.f32.mrf.mxu0
    %v1749 = vadd.f32 %v1651, %v1748
    %v1750 = vpop.f32.mrf.mxu0
    %v1751 = vpop.f32.mrf.mxu0
    %v1752 = vpop.f32.mrf.mxu0
    %1753 = vdwg.mxu0
    %v1754 = vld [vmem:[#allocation5] sm:$0xe]
    %v1755 = vld [vmem:[#allocation5 + $0x14] sm:$0xe]
    %v1760 = vrot.slane %v1754, 5
    %v1761 = vrot.slane %v1760, 4
    %v1762 = vrot.slane %v1465, 5
    %v1763 = vsel %vm954, %v1761, %v1762
    %v1764 = vrot.slane %v1762, 4
    %v1765 = vrot.slane %v1466, 5
    %v1766 = vsel %vm954, %v1764, %v1765
    %v1767 = vrot.slane %v1765, 4
    %v1768 = vrot.slane %v1467, 5
    %v1769 = vsel %vm954, %v1767, %v1768
    %v1770 = vrot.slane %v1768, 4
    %v1771 = vrot.slane %v1473, 5
    %v1772 = vsel %vm954, %v1770, %v1771
    %v1773 = vrot.slane %v1755, 5
    %v1774 = vrot.slane %v1773, 4
    %v1775 = vrot.slane %v1469, 5
    %v1776 = vsel %vm954, %v1774, %v1775
    %v1777 = vrot.slane %v1775, 4
    %v1778 = vrot.slane %v1470, 5
    %v1779 = vsel %vm954, %v1777, %v1778
    %v1780 = vrot.slane %v1778, 4
    %v1781 = vrot.slane %v1471, 5
    %v1782 = vsel %vm954, %v1780, %v1781
    %v1783 = vrot.slane %v1781, 4
    %v1784 = vrot.slane %v1474, 5
    %v1785 = vsel %vm954, %v1783, %v1784
    %s1786 = scalar_lea.vmem %s7, 8
    %v1787 = vld [vmem:[%s1786] sm:$0xf]
    %v1788 = vunpack.c.l.b16 %v1763
    %v1789 = vunpack.c.l.b16 %v1766
    %v1790 = vunpack.c.l.b16 %v1769
    %v1791 = vunpack.c.l.b16 %v1772
    %v1792 = vunpack.c.l.b16 %v1776
    %v1793 = vunpack.c.l.b16 %v1779
    %v1794 = vunpack.c.l.b16 %v1782
    %v1795 = vunpack.c.l.b16 %v1785
    %v1796 = vpack.c.b16 %v1789, %v1788
    %v1797 = vpack.c.b16 %v1791, %v1790
    %v1798 = vpack.c.b16 %v1793, %v1792
    %v1799 = vpack.c.b16 %v1795, %v1794
    %v1801 = vsel %vm1577, %v1796, 0
    %v1804 = vsel %vm1577, %v1797, 0
    %v1807 = vsel %vm1577, %v1798, 0
    %v1810 = vsel %vm1577, %v1799, 0
    %v1813 = vsel %vm816, %v1787, 0
    %1815 = vmatprep.subr.bf16.mxu0 0
    %1816 = vmatpush1.bf16.msra.mxu0 0
    %1817 = vmatprep.subr.bf16.mxu0 0
    %1818 = vmatpush1.bf16.msra.mxu0 0
    %1819 = vmatprep.subr.bf16.mxu0 0
    %1820 = vmatpush1.bf16.msra.mxu0 0
    %1821 = vmatprep.subr.bf16.mxu0 0
    %1822 = vmatpush1.bf16.msra.mxu0 0
    %1823 = vmatprep.subr.bf16.mxu0 0
    %1824 = vmatpush1.bf16.msra.mxu0 0
    %1825 = vmatprep.subr.bf16.mxu0 0
    %1826 = vmatpush1.bf16.msra.mxu0 0
    %1827 = vmatprep.subr.bf16.mxu0 0
    %1828 = vmatpush1.bf16.msra.mxu0 0
    %1829 = vmatprep.subr.bf16.mxu0 0
    %1830 = vmatpush1.bf16.msra.mxu0 %v1813
    %1831 = vmatprep.subr.bf16.mxu0 0
    %1832 = vmatpush2.bf16.msra.mxu0 0
    %1833 = vmatprep.subr.bf16.mxu0 0
    %1834 = vmatpush2.bf16.msra.mxu0 0
    %1835 = vmatprep.subr.bf16.mxu0 0
    %1836 = vmatpush2.bf16.msra.mxu0 0
    %1837 = vmatprep.subr.bf16.mxu0 0
    %1838 = vmatpush2.bf16.msra.mxu0 0
    %1839 = vmatprep.subr.bf16.mxu0 0
    %1840 = vmatpush2.bf16.msra.mxu0 0
    %1841 = vmatprep.subr.bf16.mxu0 0
    %1842 = vmatpush2.bf16.msra.mxu0 0
    %1843 = vmatprep.subr.bf16.mxu0 0
    %1844 = vmatpush2.bf16.msra.mxu0 0
    %1845 = vmatprep.subr.bf16.mxu0 0
    %1846 = vmatpush2.bf16.msra.mxu0 0
    %1847 = vmatprep.mubr.bf16.mxu0 0
    %1848 = vmatmul.mubr.bf16.gmra.mxu0 %v1801
    %v1849 = vpop.f32.mrf.mxu0
    %v1850 = vadd.f32 0.0, %v1849
    %v1851 = vpop.f32.mrf.mxu0
    %v1852 = vpop.f32.mrf.mxu0
    %v1853 = vadd.f32 0.0, %v1852
    %v1854 = vpop.f32.mrf.mxu0
    %1855 = vmatprep.mubr.bf16.mxu0 0
    %1856 = vmatmul.mubr.bf16.gmra.mxu0 %v1804
    %v1857 = vpop.f32.mrf.mxu0
    %v1858 = vadd.f32 0.0, %v1857
    %v1859 = vpop.f32.mrf.mxu0
    %v1860 = vpop.f32.mrf.mxu0
    %v1861 = vpop.f32.mrf.mxu0
    %1862 = vmatprep.mubr.bf16.mxu0 0
    %1863 = vmatmul.mubr.bf16.gmra.mxu0 %v1807
    %v1864 = vpop.f32.mrf.mxu0
    %v1865 = vadd.f32 0.0, %v1864
    %v1866 = vpop.f32.mrf.mxu0
    %v1867 = vpop.f32.mrf.mxu0
    %v1868 = vadd.f32 0.0, %v1867
    %v1869 = vpop.f32.mrf.mxu0
    %1870 = vmatprep.mubr.bf16.mxu0 0
    %1871 = vmatmul.mubr.bf16.gmra.mxu0 %v1810
    %v1872 = vpop.f32.mrf.mxu0
    %v1873 = vadd.f32 0.0, %v1872
    %v1874 = vpop.f32.mrf.mxu0
    %v1875 = vpop.f32.mrf.mxu0
    %v1876 = vpop.f32.mrf.mxu0
    %1877 = vdwg.mxu0
    %v1878 = vadd.f32 %v1726, %v1850
    %v1879 = vadd.f32 %v1729, %v1853
    %v1880 = vadd.f32 %v1734, %v1858
    %v1881 = vadd.f32 %v1741, %v1865
    %v1882 = vadd.f32 %v1744, %v1868
    %v1883 = vadd.f32 %v1749, %v1873
    %v1884 = vld [vmem:[%s8] sm:$0x1]
    %v1886 = vlaneseq
    %v1887 = vshrl.u32 %v1886, 7
    %v1888 = vsub.s32 0, %v1887
    %v1889 = vrot.slane %v1884, %v1888
    %v1891 = vadd.f32 %v1878, %v1889
    %v1892 = vadd.f32 %v1879, %v1889
    %v1893 = vadd.f32 %v1880, %v1889
    %v1894 = vadd.f32 %v1881, %v1889
    %v1895 = vadd.f32 %v1882, %v1889
    %v1896 = vadd.f32 %v1883, %v1889
    %v1897 = vtanh.pop %v1891
    %v1898 = vtanh.pop %v1892
    %v1899 = vtanh.pop %v1893
    %v1900 = vtanh.pop %v1894
    %v1901 = vtanh.pop %v1895
    %v1902 = vtanh.pop %v1896
    %vm1903 = vcmask 31744
    %1904 = vst.msk [vmem:[%s9] sm:$0xff] %vm1903, %v1897
    %1905 = vst.msk [vmem:[%s9 + $0x8] sm:$0xff] %vm1903, %v1898
    %vm1906 = vcmask 25600
    %1907 = vst.msk [vmem:[%s9 + $0x10] sm:$0x3] %vm1906, %v1899
    %1908 = vst.msk [vmem:[%s9 + $0x18] sm:$0xff] %vm1903, %v1900
    %1909 = vst.msk [vmem:[%s9 + $0x20] sm:$0xff] %vm1903, %v1901
    %1910 = vst.msk [vmem:[%s9 + $0x28] sm:$0x3] %vm1906, %v1902
    // Predicated region
    $region54: #{a_call__.1} parent=1 // pred_check
      _
    $region55: #{a_call__.1} parent=1 // pred_check_branch
      %1912 = sbr.rel (0) target = $region57
    $region56: #{a_call__.1} parent=1 // pred_region
      _
    $region57: #{a_call__.1} parent=1 // pred_fallthru
      _
    // Predicated region
    $region58: #{a_call__.1} parent=1 // pred_check
      _
    $region59: #{a_call__.1} parent=1 // pred_check_branch
      %1914 = sbr.rel (0) target = $region61
    $region60: #{a_call__.1} parent=1 // pred_region
      _
    $region61: #{a_call__.1} parent=1 // pred_fallthru
      _
    %1915 = vsyncpa [#allocation7], 1
    %1916 = vsyncpa [#allocation9], 1
    %1917 = vsyncpa [#allocation12], 1

</llo_original>
